<compile_context>
chip_gen: v6e
topology: v6e:2x2x1
jax: 0.10.0
libtpu: 0.0.40
codegen_flags: <defaults>
</compile_context>

<pallas_src>
import functools

import jax
import jax.numpy as jnp
from jax.experimental import pallas as pl
from jax.experimental.pallas import tpu as pltpu


_ROW_TILE_OVERRIDE = None           # test hook: cap the conv row tile


# ----------------------------------------------------------------------------
# Per-generation VMEM budgets
# ----------------------------------------------------------------------------
@functools.lru_cache(maxsize=None)
def _vmem_budgets():
    phys = 64 * 1024 * 1024
    try:
        phys = int(pltpu.get_tpu_info().vmem_capacity_bytes)
    except Exception:
        pass
    if phys >= 100 * 1024 * 1024:                 # v4 / v5e / v6e: 128 MiB VMEM
        return 96 * 1024 * 1024, 40 * 1024 * 1024
    return 48 * 1024 * 1024, 18 * 1024 * 1024     # v7x (64 MiB) / unknown


def _vmem_limit():
    return _vmem_budgets()[0]


def _tile_budget():
    return _vmem_budgets()[1]


def _round_up(x, m):
    return (x + m - 1) // m * m


def _sublane_tile(nbytes):
    return {4: 8, 2: 16, 1: 32}.get(nbytes, 8)


def _padded_bytes(shape, nbytes):
    """VMEM bytes of an array, accounting for (sublane, lane) layout padding."""
    shape = tuple(shape)
    if len(shape) < 2:
        shape = (1,) * (2 - len(shape)) + shape
    lead = 1
    for d in shape[:-2]:
        lead *= d
    return (lead * _round_up(shape[-2], _sublane_tile(nbytes))
            * _round_up(shape[-1], 128) * nbytes)


def _conv_vmem_bytes(TH, W, cins, Cout, K, comp_bytes, out_bytes, fold_full,
                     instance_norm):
    p = (K - 1) // 2
    Hs, Wp = TH + 2 * p, W + 2 * p
    total = 0
    for i, ci in enumerate(cins):
        total += _padded_bytes((2, Hs, Wp, ci), comp_bytes)      # dbl-buffered strip
        if K > 1:
            total += _padded_bytes((K, Hs, W, ci), comp_bytes)   # hoisted kx slabs
        depth = K * K * ci if fold_full[i] else K * ci
        total += _padded_bytes((TH * W, depth), comp_bytes)      # im2col patch
        total += 2 * _padded_bytes((K, K * ci, Cout), comp_bytes)  # resident weights
    total += _padded_bytes((TH * W, Cout), 4)                    # f32 accumulator
    total += 2 * _padded_bytes((TH, W, Cout), out_bytes)         # output blocks
    if instance_norm:
        total += 2 * _padded_bytes((2, Cout), 4)
    return total


def _pick_row_tile(H, W, cins, Cout, K, comp_bytes, out_bytes, fold_full,
                   instance_norm):
    p = (K - 1) // 2
    cap = _ROW_TILE_OVERRIDE if _ROW_TILE_OVERRIDE else H
    budget = _tile_budget()
    cands = [th for th in range(1, H + 1)
             if H % th == 0 and (th >= p or th == H)]
    best = None
    for th in cands:
        if th > cap:
            continue
        if _conv_vmem_bytes(th, W, cins, Cout, K, comp_bytes, out_bytes,
                            fold_full, instance_norm) <= budget:
            best = th
    if best is None:
        small = [th for th in cands if th <= cap]
        best = small[0] if small else cands[0]
    return best


# ----------------------------------------------------------------------------
# Pallas kernel: row-tiled same-padding conv2d (+ bias, IN, activation)
# ----------------------------------------------------------------------------
def _conv_kernel(*refs, n_in, K, TH, T, W, cins, Cout, p,
                 activation, fused_in, emit_stats, eps, fold_full):
    xs_hbm = refs[:n_in]
    ws = refs[n_in:2 * n_in]
    b_ref = refs[2 * n_in]
    y_ref = refs[2 * n_in + 1]
    pos = 2 * n_in + 2
    stats_ref = None
    if emit_stats:
        stats_ref = refs[pos]
        pos += 1
    xbufs = refs[pos:pos + n_in]
    sem = refs[pos + n_in]

    b = pl.program_id(0)
    t = pl.program_id(1)
    Hs = TH + 2 * p
    Wp = W + 2 * p
    slot = t % 2

    # --- manual halo-strip DMAs straight from the *unpadded* HBM inputs -----
    def copies(tt, sl, which):
        descs = []
        for i in range(n_in):
            if which == 0:        # body rows
                src = xs_hbm[i].at[b, pl.ds(tt * TH, TH), :, :]
                dst = xbufs[i].at[sl, pl.ds(p, TH), pl.ds(p, W), :]
            elif which == 1:      # top halo rows
                src = xs_hbm[i].at[b, pl.ds(tt * TH - p, p), :, :]
                dst = xbufs[i].at[sl, pl.ds(0, p), pl.ds(p, W), :]
            else:                 # bottom halo rows
                src = xs_hbm[i].at[b, pl.ds((tt + 1) * TH, p), :, :]
                dst = xbufs[i].at[sl, pl.ds(p + TH, p), pl.ds(p, W), :]
            descs.append(pltpu.make_async_copy(src, dst, sem.at[i, sl, which]))
        return descs

    def start(tt, sl, which):
        for cp in copies(tt, sl, which):
            cp.start()

    def wait(tt, sl, which):
        for cp in copies(tt, sl, which):
            cp.wait()

    # prime this batch's pipeline on the first row tile
    @pl.when(t == 0)
    def _():
        start(0, 0, 0)
        if p > 0 and T > 1:
            start(0, 0, 2)

    # wait for the current strip; materialize the zero halo directly in VMEM
    wait(t, slot, 0)
    if p > 0:
        if T > 1:
            @pl.when(t > 0)
            def _():
                wait(t, slot, 1)

            @pl.when(t == 0)
            def _():
                for i in range(n_in):
                    xbufs[i][slot, pl.ds(0, p), :, :] = jnp.zeros(
                        (p, Wp, cins[i]), xbufs[i].dtype)

            @pl.when(t < T - 1)
            def _():
                wait(t, slot, 2)

            @pl.when(t == T - 1)
            def _():
                for i in range(n_in):
                    xbufs[i][slot, pl.ds(p + TH, p), :, :] = jnp.zeros(
                        (p, Wp, cins[i]), xbufs[i].dtype)
        else:
            for i in range(n_in):
                xbufs[i][slot, pl.ds(0, p), :, :] = jnp.zeros(
                    (p, Wp, cins[i]), xbufs[i].dtype)
                xbufs[i][slot, pl.ds(p + TH, p), :, :] = jnp.zeros(
                    (p, Wp, cins[i]), xbufs[i].dtype)
        for i in range(n_in):     # left/right column halo (never touched by DMA)
            xbufs[i][slot, :, pl.ds(0, p), :] = jnp.zeros(
                (Hs, p, cins[i]), xbufs[i].dtype)
            xbufs[i][slot, :, pl.ds(p + W, p), :] = jnp.zeros(
                (Hs, p, cins[i]), xbufs[i].dtype)

    # prefetch the next strip while computing this one
    if T > 1:
        @pl.when(t + 1 < T)
        def _():
            nxt = t + 1
            start(nxt, 1 - slot, 0)
            if p > 0:
                start(nxt, 1 - slot, 1)

                @pl.when(nxt < T - 1)
                def _():
                    start(nxt, 1 - slot, 2)

    # --- compute: im2col (kx shifts hoisted, ky optionally folded) on MXU ---
    acc = jnp.zeros((TH * W, Cout), jnp.float32)
    for i in range(n_in):
        ci = cins[i]
        if K == 1:
            patch = xbufs[i][slot].reshape(TH * W, ci)
            acc = acc + jnp.dot(patch, ws[i][0],
                                preferred_element_type=jnp.float32)
            continue
        # one sublane-shifted slab per kx tap, reused by every ky
        shifted = [xbufs[i][slot, :, pl.ds(kx, W), :] for kx in range(K)]
        if fold_full[i]:
            pieces = [shifted[kx][ky:ky + TH]
                      for ky in range(K) for kx in range(K)]
            patch = jnp.concatenate(pieces, axis=-1).reshape(TH * W, K * K * ci)
            w_full = ws[i][...].reshape(K * K * ci, Cout)
            acc = acc + jnp.dot(patch, w_full,
                                preferred_element_type=jnp.float32)
        else:
            for ky in range(K):
                patch = jnp.concatenate(
                    [shifted[kx][ky:ky + TH] for kx in range(K)],
                    axis=-1).reshape(TH * W, K * ci)
                acc = acc + jnp.dot(patch, ws[i][ky],
                                    preferred_element_type=jnp.float32)

    acc = acc + b_ref[...]

    if emit_stats:
        # two-pass InstanceNorm: centered per-tile stats (sum, sum of squared
        # deviations from the tile mean) for a numerically robust combine.
        npix = float(TH * W)
        s = jnp.sum(acc, axis=0, keepdims=True)
        d = acc - s / npix
        m2 = jnp.sum(d * d, axis=0, keepdims=True)
        stats_ref[0, 0] = jnp.concatenate([s, m2], axis=0)
    else:
        if fused_in:
            mean = jnp.mean(acc, axis=0, keepdims=True)
            cen = acc - mean
            var = jnp.mean(cen * cen, axis=0, keepdims=True)
            acc = cen * jax.lax.rsqrt(var + eps)
        if activation == "relu":
            acc = jnp.maximum(acc, 0.0)
        elif activation == "lrelu":
            acc = jnp.where(acc > 0, acc, 0.01 * acc)

    y_ref[0] = acc.reshape(TH, W, Cout).astype(y_ref.dtype)


def _norm_relu_kernel(y_ref, s_ref, t_ref, o_ref):
    y = y_ref[...].astype(jnp.float32)
    c = y.shape[-1]
    o = y * s_ref[...].reshape(1, 1, 1, c) + t_ref[...].reshape(1, 1, 1, c)
    o_ref[...] = jnp.maximum(o, 0.0).astype(o_ref.dtype)


def _apply_norm_relu(y, scale, shift, *, TH, out_dtype):
    B, H, W, C = y.shape
    T = H // TH
    return pl.pallas_call(
        _norm_relu_kernel,
        out_shape=jax.ShapeDtypeStruct((B, H, W, C), out_dtype),
        grid=(B, T),
        in_specs=[pl.BlockSpec((1, TH, W, C), lambda b, t: (b, t, 0, 0)),
                  pl.BlockSpec((1, C), lambda b, t: (b, 0)),
                  pl.BlockSpec((1, C), lambda b, t: (b, 0))],
        out_specs=pl.BlockSpec((1, TH, W, C), lambda b, t: (b, t, 0, 0)),
        compiler_params=pltpu.CompilerParams(
            dimension_semantics=("parallel", "parallel"),
            vmem_limit_bytes=_vmem_limit()),
    )(y, scale, shift)


def conv2d_same(xs, w, bias, *, dtype, instance_norm=False, activation=None,
                out_dtype=None, eps=1e-5):
    """Same-padding conv2d (+ bias, optional InstanceNorm, activation).

    xs: NHWC array or list of NHWC arrays (channel concat folded into the conv
        by splitting `w` along Cin); w: (K, K, sum(Cin_i), Cout); bias: (Cout,).
    Inputs are consumed UNPADDED; the halo is materialized in VMEM.
    """
    if not isinstance(xs, (list, tuple)):
        xs = [xs]
    xs = [x.astype(dtype) for x in xs]
    B, H, W, _ = xs[0].shape
    cins = [int(x.shape[-1]) for x in xs]
    K = int(w.shape[0])
    Cout = int(w.shape[-1])
    p = (K - 1) // 2
    out_dtype = out_dtype or dtype
    comp_bytes = jnp.dtype(dtype).itemsize
    out_bytes = max(jnp.dtype(out_dtype).itemsize, comp_bytes)
    fold_full = tuple((K > 1) and (ci >= 32) and ((K * ci) % 8 == 0)
                      for ci in cins)

    TH = _pick_row_tile(H, W, cins, Cout, K, comp_bytes, out_bytes, fold_full,
                        bool(instance_norm))
    T = H // TH
    two_pass = bool(instance_norm) and T > 1
    fused_in = bool(instance_norm) and not two_pass

    ws, off = [], 0
    for ci in cins:
        ws.append(w[:, :, off:off + ci, :].reshape(K, K * ci, Cout).astype(dtype))
        off += ci
    b2 = bias.reshape(1, Cout).astype(jnp.float32)

    kernel = functools.partial(
        _conv_kernel, n_in=len(xs), K=K, TH=TH, T=T, W=W, cins=tuple(cins),
        Cout=Cout, p=p, activation=activation, fused_in=fused_in,
        emit_stats=two_pass, eps=eps, fold_full=fold_full)

    in_specs = ([pl.BlockSpec(memory_space=pl.ANY)] * len(xs)
                + [pl.BlockSpec((K, K * ci, Cout), lambda b, t: (0, 0, 0))
                   for ci in cins]
                + [pl.BlockSpec((1, Cout), lambda b, t: (0, 0))])

    y_dtype = dtype if two_pass else out_dtype
    out_shape = [jax.ShapeDtypeStruct((B, H, W, Cout), y_dtype)]
    out_specs = [pl.BlockSpec((1, TH, W, Cout), lambda b, t: (b, t, 0, 0))]
    if two_pass:
        out_shape.append(jax.ShapeDtypeStruct((B, T, 2, Cout), jnp.float32))
        out_specs.append(pl.BlockSpec((1, 1, 2, Cout), lambda b, t: (b, t, 0, 0)))

    scratch = [pltpu.VMEM((2, TH + 2 * p, W + 2 * p, ci), dtype) for ci in cins]
    scratch.append(pltpu.SemaphoreType.DMA((len(xs), 2, 3)))

    res = pl.pallas_call(
        kernel,
        out_shape=tuple(out_shape) if two_pass else out_shape[0],
        grid=(B, T),
        in_specs=in_specs,
        out_specs=tuple(out_specs) if two_pass else out_specs[0],
        scratch_shapes=scratch,
        compiler_params=pltpu.CompilerParams(
            dimension_semantics=("parallel", "arbitrary"),
            vmem_limit_bytes=_vmem_limit()),
    )(*xs, *ws, b2)

    if not two_pass:
        return res

    y, stats = res
    npix_tile = float(H * W) / T
    mean_t = stats[:, :, 0, :] / npix_tile                   # (B, T, C)
    m2_t = stats[:, :, 1, :]
    mean = jnp.mean(mean_t, axis=1)                          # (B, C)
    m2 = jnp.sum(m2_t, axis=1) + npix_tile * jnp.sum(
        jnp.square(mean_t - mean[:, None, :]), axis=1)
    var = jnp.maximum(m2 / float(H * W), 0.0)
    scale = jax.lax.rsqrt(var + eps)
    shift = -mean * scale
    return _apply_norm_relu(y, scale, shift, TH=TH, out_dtype=out_dtype)


# ----------------------------------------------------------------------------
# Pallas kernel: both GeneralisedIFT2 layers of dAUTOMAP fused, per batch
# ----------------------------------------------------------------------------
def _gift_kernel(x_ref, w1a, b1a, w2a, b2a, w1b, b1b, w2b, b2b, o_ref, *, N):
    f32 = jnp.float32
    cdt = x_ref.dtype

    def dot_nn(a, b):      # a @ b
        return jax.lax.dot_general(a, b, (((1,), (0,)), ((), ())),
                                   preferred_element_type=f32)

    def dot_nt(a, b):      # a @ b.T  (transpose folded into the MXU)
        return jax.lax.dot_general(a, b, (((1,), (1,)), ((), ())),
                                   preferred_element_type=f32)

    x0 = x_ref[0, 0:N, :]
    x1 = x_ref[0, N:2 * N, :]

    # domain_transform 1: idft1 -> relu ; idft2 -> tanh (stored transposed)
    a = []
    for c in range(2):
        s = dot_nn(w1a[c, 0], x0) + dot_nn(w1a[c, 1], x1)
        a.append(jnp.maximum(s + b1a[c], 0.0).astype(cdt))          # [k, m]
    h = []
    for c in range(2):
        s = dot_nt(w2a[c, 0], a[0]) + dot_nt(w2a[c, 1], a[1])
        h.append(jnp.tanh(s + b2a[c]).astype(cdt))                  # [k2, k]

    # domain_transform 2 (consumes h^T, i.e. the standard layout)
    cc = []
    for c in range(2):
        s = dot_nt(w1b[c, 0], h[0]) + dot_nt(w1b[c, 1], h[1])
        cc.append(jnp.maximum(s + b1b[c], 0.0).astype(cdt))         # [k', k2]
    # last layer: transpose folded into the MXU -> output already standard
    for c in range(2):
        s = dot_nt(cc[0], w2b[c, 0]) + dot_nt(cc[1], w2b[c, 1])     # [k', k2']
        o_ref[0, c * N:(c + 1) * N, :] = jnp.tanh(s + b2b[c]).astype(o_ref.dtype)


def dautomap_gift(k_nchw, p, dtype):
    B, C, N, _ = k_nchw.shape          # C == 2
    x = k_nchw.reshape(B, C * N, N).astype(dtype)

    def wblk(a):    # (2N,2N) -> (2,2,N,N) blocks, no lane-unaligned slicing
        return a.reshape(2, N, 2, N).transpose(0, 2, 1, 3).astype(dtype)

    def bcol(a):    # column bias (2, N, 1)
        return a.reshape(2, N, 1).astype(jnp.float32)

    def brow(a):    # row bias (2, 1, N) for the transposed final layer
        return a.reshape(2, 1, N).astype(jnp.float32)

    wspec = pl.BlockSpec((2, 2, N, N), lambda i: (0, 0, 0, 0))
    bcspec = pl.BlockSpec((2, N, 1), lambda i: (0, 0, 0))
    brspec = pl.BlockSpec((2, 1, N), lambda i: (0, 0, 0))
    return pl.pallas_call(
        functools.partial(_gift_kernel, N=N),
        out_shape=jax.ShapeDtypeStruct((B, 2 * N, N), dtype),
        grid=(B,),
        in_specs=[pl.BlockSpec((1, 2 * N, N), lambda i: (i, 0, 0)),
                  wspec, bcspec, wspec, bcspec, wspec, bcspec, wspec, brspec],
        out_specs=pl.BlockSpec((1, 2 * N, N), lambda i: (i, 0, 0)),
        compiler_params=pltpu.CompilerParams(
            dimension_semantics=("parallel",),
            vmem_limit_bytes=_vmem_limit()),
    )(x,
      wblk(p["dt1"]["w1"]), bcol(p["dt1"]["b1"]),
      wblk(p["dt1"]["w2"]), bcol(p["dt1"]["b2"]),
      wblk(p["dt2"]["w1"]), bcol(p["dt2"]["b1"]),
      wblk(p["dt2"]["w2"]), brow(p["dt2"]["b2"]))


# ----------------------------------------------------------------------------
# Plain-JAX glue (resampling, padding)
# ----------------------------------------------------------------------------
def maxpool2x(x):  # NHWC, kernel = stride = 2
    B, H, W, C = x.shape
    return x.reshape(B, H // 2, 2, W // 2, 2, C).max(axis=(2, 4))


def upsample2x_bilinear(x):  # NHWC, matches F.interpolate(align_corners=False)
    def interp_axis(a, axis, size):
        out_idx = jnp.arange(2 * size, dtype=jnp.float32)
        src = jnp.clip((out_idx + 0.5) / 2.0 - 0.5, 0.0, float(size - 1))
        i0 = jnp.floor(src).astype(jnp.int32)
        i1 = jnp.minimum(i0 + 1, size - 1)
        w1 = src - i0.astype(jnp.float32)
        w0 = 1.0 - w1
        a0 = jnp.take(a, i0, axis=axis)
        a1 = jnp.take(a, i1, axis=axis)
        shp = [1] * a.ndim
        shp[axis] = 2 * size
        return a0 * w0.reshape(shp) + a1 * w1.reshape(shp)

    B, H, W, C = x.shape
    return interp_axis(interp_axis(x, 1, H), 2, W)


def complex_img_pad(img_nhwc, target_hw):
    # TODO(synk): confirm exact left/right split convention of T.complex_img_pad;
    # centered zero-pad assumed (identity when shapes already match).
    H, W = img_nhwc.shape[1:3]
    TH, TW = target_hw
    ph, pw = TH - H, TW - W
    return jnp.pad(img_nhwc,
                   ((0, 0), (ph // 2, ph - ph // 2), (pw // 2, pw - pw // 2), (0, 0)))


# ----------------------------------------------------------------------------
# Sub-networks
# ----------------------------------------------------------------------------
def dautomap_forward(k_nchw, p, dtype):
    Bsz, C, N, _ = k_nchw.shape
    z = dautomap_gift(k_nchw, p, dtype)                          # (B, 2N, N)
    y = jnp.transpose(z.reshape(Bsz, 2, N, N), (0, 2, 3, 1))     # NHWC
    y = conv2d_same(y, p["refine"][0]["w"], p["refine"][0]["b"],
                    dtype=dtype, activation="relu")
    y = conv2d_same(y, p["refine"][1]["w"], p["refine"][1]["b"],
                    dtype=dtype, activation="relu")
    # TODO(synk): ConvTranspose2d(64,2,7,stride=1,padding=3) equals a same-pad
    # conv with spatially-flipped kernel + swapped channel axes; synthetic
    # weights here parameterize the equivalent conv directly.
    y = conv2d_same(y, p["refine"][2]["w"], p["refine"][2]["b"], dtype=dtype)
    return y                                                     # NHWC, 2 ch


def unet_block(xs, bp, dtype):
    h = conv2d_same(xs, bp["c1"]["w"], bp["c1"]["b"], dtype=dtype,
                    instance_norm=True, activation="relu")
    h = conv2d_same(h, bp["c2"]["w"], bp["c2"]["b"], dtype=dtype,
                    instance_norm=True, activation="relu")
    return h    # Dropout2d(drop_prob=0) is identity


def unet_forward(x_nhwc, p, dtype):
    stack, out = [], x_nhwc
    for bp in p["down"]:
        out = unet_block(out, bp, dtype)
        stack.append(out)
        out = maxpool2x(out)
    out = unet_block(out, p["mid"], dtype)
    for bp in p["up"]:
        up = upsample2x_bilinear(out)
        out = unet_block([up, stack.pop()], bp, dtype)   # concat folded into conv
    # three activation-free 1x1 convs composed into one (exact)
    m1, m2, m3 = (cp["w"][0, 0] for cp in p["conv2"])
    b1, b2, b3 = (cp["b"] for cp in p["conv2"])
    m_eff = m1 @ m2 @ m3
    b_eff = (b1 @ m2 + b2) @ m3 + b3
    return conv2d_same(out, m_eff[None, None], b_eff, dtype=dtype)


def recon_synergy_forward(x_crop, k_crop, x, p, dtype=jnp.bfloat16):
    """Inputs/outputs NCHW (PyTorch convention): x_crop, k_crop, x: (B,2,H,W)."""
    dpred = dautomap_forward(k_crop, p, dtype)                          # NHWC
    upred = unet_forward(jnp.transpose(x_crop, (0, 2, 3, 1)), p, dtype) # NHWC
    x_nhwc = jnp.transpose(x, (0, 2, 3, 1))
    th, tw = x_nhwc.shape[1], x_nhwc.shape[2]
    dpred = complex_img_pad(dpred, (th, tw))
    upred = complex_img_pad(upred, (th, tw))
    # Re_layer: the 6-channel concat is folded into the first conv.
    out = conv2d_same([upred, dpred, x_nhwc], p["re"][0]["w"], p["re"][0]["b"],
                      dtype=dtype, activation="lrelu")
    for cp in p["re"][1:-1]:
        out = conv2d_same(out, cp["w"], cp["b"], dtype=dtype, activation="lrelu")
    out = conv2d_same(out, p["re"][-1]["w"], p["re"][-1]["b"], dtype=dtype,
                      out_dtype=jnp.float32)
    return jnp.transpose(out, (0, 3, 1, 2))                             # NCHW


# ----------------------------------------------------------------------------
# Pure-JAX reference (same math, XLA ops) for correctness checking
# ----------------------------------------------------------------------------
def _ref_conv(x, w, b, activation=None, instance_norm=False, eps=1e-5):
    K = w.shape[0]
    p = (K - 1) // 2
    y = jax.lax.conv_general_dilated(
        x, w, (1, 1), [(p, p), (p, p)],
        dimension_numbers=("NHWC", "HWIO", "NHWC"),
        precision=jax.lax.Precision.HIGHEST) + b
    if instance_norm:
        m = jnp.mean(y, axis=(1, 2), keepdims=True)
        v = jnp.var(y, axis=(1, 2), keepdims=True)
        y = (y - m) * jax.lax.rsqrt(v + eps)
    if activation == "relu":
        y = jnp.maximum(y, 0.0)
    elif activation == "lrelu":
        y = jnp.where(y > 0, y, 0.01 * y)
    return y


def _ref_gift(x_nchw, gp):
    Bsz, C, N, _ = x_nchw.shape
    hi = jax.lax.Precision.HIGHEST
    xf = x_nchw.reshape(Bsz, C * N, N)
    y = jnp.einsum("oi,bim->bom", gp["w1"], xf, precision=hi) + gp["b1"][None, :, None]
    y = jnp.transpose(y.reshape(Bsz, C, N, N), (0, 1, 3, 2))
    y = jnp.maximum(y, 0.0)                                     # nl = 'relu'
    yf = y.reshape(Bsz, C * N, N)
    z = jnp.einsum("oi,bim->bom", gp["w2"], yf, precision=hi) + gp["b2"][None, :, None]
    return jnp.transpose(z.reshape(Bsz, C, N, N), (0, 1, 3, 2))


def _ref_unet_block(x, bp):
    x = _ref_conv(x, bp["c1"]["w"], bp["c1"]["b"], activation="relu", instance_norm=True)
    x = _ref_conv(x, bp["c2"]["w"], bp["c2"]["b"], activation="relu", instance_norm=True)
    return x


def recon_synergy_forward_ref(x_crop, k_crop, x, p):
    # dAUTOMAP
    z = jnp.tanh(_ref_gift(k_crop, p["dt1"]))
    z = jnp.tanh(_ref_gift(z, p["dt2"]))
    y = jnp.transpose(z, (0, 2, 3, 1))
    y = _ref_conv(y, p["refine"][0]["w"], p["refine"][0]["b"], activation="relu")
    y = _ref_conv(y, p["refine"][1]["w"], p["refine"][1]["b"], activation="relu")
    dpred = _ref_conv(y, p["refine"][2]["w"], p["refine"][2]["b"])
    # UNet
    out = jnp.transpose(x_crop, (0, 2, 3, 1))
    stack = []
    for bp in p["down"]:
        out = _ref_unet_block(out, bp)
        stack.append(out)
        out = maxpool2x(out)
    out = _ref_unet_block(out, p["mid"])
    for bp in p["up"]:
        out = jnp.concatenate([upsample2x_bilinear(out), stack.pop()], axis=-1)
        out = _ref_unet_block(out, bp)
    for cp in p["conv2"]:
        out = _ref_conv(out, cp["w"], cp["b"])
    upred = out
    # fusion
    x_nhwc = jnp.transpose(x, (0, 2, 3, 1))
    th, tw = x_nhwc.shape[1], x_nhwc.shape[2]
    out = jnp.concatenate([complex_img_pad(upred, (th, tw)),
                           complex_img_pad(dpred, (th, tw)), x_nhwc], axis=-1)
    for cp in p["re"][:-1]:
        out = _ref_conv(out, cp["w"], cp["b"], activation="lrelu")
    out = _ref_conv(out, p["re"][-1]["w"], p["re"][-1]["b"])
    return jnp.transpose(out, (0, 3, 1, 2))


# ----------------------------------------------------------------------------
# Deterministic synthetic parameters (shapes follow the PyTorch __init__)
# ----------------------------------------------------------------------------
def init_params(key, N, chans, num_pools):
    ks = iter(jax.random.split(key, 256))

    def w(shape, scale=0.1):
        return (scale * jax.random.normal(next(ks), shape)).astype(jnp.float32)

    def conv_p(cin, cout, k):
        return {"w": w((k, k, cin, cout)), "b": w((cout,))}

    def block_p(cin, cout):
        return {"c1": conv_p(cin, cout, 3), "c2": conv_p(cout, cout, 3)}

    twoN = 2 * N

    def gift_p():
        return {"w1": w((twoN, twoN)), "b1": w((twoN,)),
                "w2": w((twoN, twoN)), "b2": w((twoN,))}

    p = {}
    # dAUTOMAP (KI_layer)
    p["dt1"] = gift_p()
    p["dt2"] = gift_p()
    p["refine"] = [conv_p(2, 64, 5), conv_p(64, 64, 5), conv_p(64, 2, 7)]
    # UNet (II_layer)
    down = [block_p(2, chans)]
    ch = chans
    for _ in range(num_pools - 1):
        down.append(block_p(ch, ch * 2))
        ch *= 2
    p["down"] = down
    p["mid"] = block_p(ch, ch)
    up = []
    for _ in range(num_pools - 1):
        up.append(block_p(ch * 2, ch // 2))
        ch //= 2
    up.append(block_p(ch * 2, ch))
    p["up"] = up
    p["conv2"] = [conv_p(ch, ch // 2, 1), conv_p(ch // 2, 2, 1), conv_p(2, 2, 1)]
    # Re_layer: conv_block(n_ch=6, nd=5, nf=32, n_out=2)
    p["re"] = ([conv_p(6, 32, 3)] +
               [conv_p(32, 32, 3) for _ in range(3)] +
               [conv_p(32, 2, 3)])
    return p


if __name__ == "__main__":
    B, N = 2, 16             # small stand-in for patch_size=320
    chans, num_pools = 4, 2  # small stand-ins for args.num_chans / args.num_pools

    params = init_params(jax.random.PRNGKey(1), N=N, chans=chans, num_pools=num_pools)

    key = jax.random.PRNGKey(0)
    kx, kk, kf = jax.random.split(key, 3)
    x_crop = jax.random.normal(kx, (B, 2, N, N), jnp.float32)
    k_crop = jax.random.normal(kk, (B, 2, N, N), jnp.float32)
    x_full = jax.random.normal(kf, (B, 2, N, N), jnp.float32)

    ref = jax.block_until_ready(recon_synergy_forward_ref(x_crop, k_crop, x_full, params))

    # 1) f32 run with forced 4-row tiles: exercises the multi-tile manual-DMA
    #    halo/prefetch chain, the two-pass InstanceNorm, and the multi-input
    #    (concat-folded) convs; checked tightly against the pure-JAX reference.
    _ROW_TILE_OVERRIDE = 4
    out_f32 = jax.block_until_ready(
        recon_synergy_forward(x_crop, k_crop, x_full, params, dtype=jnp.float32))
    assert out_f32.shape == (B, 2, N, N)
    assert bool(jnp.all(jnp.isfinite(out_f32)))
    err32 = float(jnp.linalg.norm(out_f32 - ref) / (jnp.linalg.norm(ref) + 1e-9))
    assert err32 < 0.05, f"f32 Pallas vs reference rel-L2 error too large: {err32}"

    # 2) production bf16 run (single-tile fused-InstanceNorm path at this size).
    _ROW_TILE_OVERRIDE = None
    recons = jax.block_until_ready(
        recon_synergy_forward(x_crop, k_crop, x_full, params, dtype=jnp.bfloat16))
    assert recons.shape == (B, 2, N, N)
    assert bool(jnp.all(jnp.isfinite(recons)))
    errbf = float(jnp.linalg.norm(recons - ref) / (jnp.linalg.norm(ref) + 1e-9))
    assert errbf < 0.25, f"bf16 Pallas vs reference rel-L2 error too large: {errbf}"

    print("KERNEL_OK")
</pallas_src>

<mosaic_0001>
module attributes {stable_mosaic.version = 11 : i64} {
  func.func @_gift_kernel(%arg0: i32, %arg1: memref<1x32x16xf32, #tpu.memory_space<vmem>>, %arg2: memref<2x2x16x16xf32, #tpu.memory_space<vmem>>, %arg3: memref<2x16x1xf32, #tpu.memory_space<vmem>>, %arg4: memref<2x2x16x16xf32, #tpu.memory_space<vmem>>, %arg5: memref<2x16x1xf32, #tpu.memory_space<vmem>>, %arg6: memref<2x2x16x16xf32, #tpu.memory_space<vmem>>, %arg7: memref<2x16x1xf32, #tpu.memory_space<vmem>>, %arg8: memref<2x2x16x16xf32, #tpu.memory_space<vmem>>, %arg9: memref<2x1x16xf32, #tpu.memory_space<vmem>>, %arg10: memref<1x32x16xf32, #tpu.memory_space<vmem>>) attributes {dimension_semantics = [#tpu.dimension_semantics<parallel>], iteration_bounds = array<i64: 2>, scalar_prefetch = 0 : i64, scratch_operands = 0 : i64, tpu.core_type = #tpu.core_type<tc>, window_params = [{transform_indices = @transform_0, window_bounds = array<i64: 1, 32, 16>}, {pipeline_mode = #tpu.pipeline_mode<synchronous>, transform_indices = @transform_1, window_bounds = array<i64: 2, 2, 16, 16>}, {pipeline_mode = #tpu.pipeline_mode<synchronous>, transform_indices = @transform_2, window_bounds = array<i64: 2, 16, 1>}, {pipeline_mode = #tpu.pipeline_mode<synchronous>, transform_indices = @transform_3, window_bounds = array<i64: 2, 2, 16, 16>}, {pipeline_mode = #tpu.pipeline_mode<synchronous>, transform_indices = @transform_4, window_bounds = array<i64: 2, 16, 1>}, {pipeline_mode = #tpu.pipeline_mode<synchronous>, transform_indices = @transform_5, window_bounds = array<i64: 2, 2, 16, 16>}, {pipeline_mode = #tpu.pipeline_mode<synchronous>, transform_indices = @transform_6, window_bounds = array<i64: 2, 16, 1>}, {pipeline_mode = #tpu.pipeline_mode<synchronous>, transform_indices = @transform_7, window_bounds = array<i64: 2, 2, 16, 16>}, {pipeline_mode = #tpu.pipeline_mode<synchronous>, transform_indices = @transform_8, window_bounds = array<i64: 2, 1, 16>}, {transform_indices = @transform_9, window_bounds = array<i64: 1, 32, 16>}]} {
    %c0 = arith.constant 0 : index
    %c0_0 = arith.constant 0 : index
    %c0_1 = arith.constant 0 : index
    %0 = vector.load %arg1[%c0, %c0_0, %c0_1] : memref<1x32x16xf32, #tpu.memory_space<vmem>>, vector<1x16x16xf32>
    %1 = vector.shape_cast %0 : vector<1x16x16xf32> to vector<16x16xf32>
    %c0_2 = arith.constant 0 : index
    %c16 = arith.constant 16 : index
    %c0_3 = arith.constant 0 : index
    %2 = vector.load %arg1[%c0_2, %c16, %c0_3] : memref<1x32x16xf32, #tpu.memory_space<vmem>>, vector<1x16x16xf32>
    %3 = vector.shape_cast %2 : vector<1x16x16xf32> to vector<16x16xf32>
    %c0_4 = arith.constant 0 : index
    %c0_5 = arith.constant 0 : index
    %c0_6 = arith.constant 0 : index
    %c0_7 = arith.constant 0 : index
    %4 = vector.load %arg2[%c0_4, %c0_5, %c0_6, %c0_7] : memref<2x2x16x16xf32, #tpu.memory_space<vmem>>, vector<1x1x16x16xf32>
    %5 = vector.shape_cast %4 : vector<1x1x16x16xf32> to vector<16x16xf32>
    %cst = arith.constant dense<0.000000e+00> : vector<16x16xf32>
    %6 = tpu.matmul %5, %1, %cst {dimension_numbers = #tpu.dot_dimension_numbers<[1], [0], [0], [1], [0, 0, 1, 1], [], []>} : vector<16x16xf32>, vector<16x16xf32>, vector<16x16xf32> -> vector<16x16xf32>
    %c0_8 = arith.constant 0 : index
    %c1 = arith.constant 1 : index
    %c0_9 = arith.constant 0 : index
    %c0_10 = arith.constant 0 : index
    %7 = vector.load %arg2[%c0_8, %c1, %c0_9, %c0_10] : memref<2x2x16x16xf32, #tpu.memory_space<vmem>>, vector<1x1x16x16xf32>
    %8 = vector.shape_cast %7 : vector<1x1x16x16xf32> to vector<16x16xf32>
    %cst_11 = arith.constant dense<0.000000e+00> : vector<16x16xf32>
    %9 = tpu.matmul %8, %3, %cst_11 {dimension_numbers = #tpu.dot_dimension_numbers<[1], [0], [0], [1], [0, 0, 1, 1], [], []>} : vector<16x16xf32>, vector<16x16xf32>, vector<16x16xf32> -> vector<16x16xf32>
    %10 = arith.addf %6, %9 : vector<16x16xf32>
    %c0_12 = arith.constant 0 : index
    %c0_13 = arith.constant 0 : index
    %c0_14 = arith.constant 0 : index
    %11 = vector.load %arg3[%c0_12, %c0_13, %c0_14] : memref<2x16x1xf32, #tpu.memory_space<vmem>>, vector<1x16x1xf32>
    %12 = vector.shape_cast %11 : vector<1x16x1xf32> to vector<16x1xf32>
    %13 = vector.broadcast %12 : vector<16x1xf32> to vector<16x16xf32>
    %14 = arith.addf %10, %13 : vector<16x16xf32>
    %cst_15 = arith.constant 0.000000e+00 : f32
    %15 = vector.broadcast %cst_15 : f32 to vector<16x16xf32>
    %16 = arith.maximumf %14, %15 : vector<16x16xf32>
    %c1_16 = arith.constant 1 : index
    %c0_17 = arith.constant 0 : index
    %c0_18 = arith.constant 0 : index
    %c0_19 = arith.constant 0 : index
    %17 = vector.load %arg2[%c1_16, %c0_17, %c0_18, %c0_19] : memref<2x2x16x16xf32, #tpu.memory_space<vmem>>, vector<1x1x16x16xf32>
    %18 = vector.shape_cast %17 : vector<1x1x16x16xf32> to vector<16x16xf32>
    %cst_20 = arith.constant dense<0.000000e+00> : vector<16x16xf32>
    %19 = tpu.matmul %18, %1, %cst_20 {dimension_numbers = #tpu.dot_dimension_numbers<[1], [0], [0], [1], [0, 0, 1, 1], [], []>} : vector<16x16xf32>, vector<16x16xf32>, vector<16x16xf32> -> vector<16x16xf32>
    %c1_21 = arith.constant 1 : index
    %c1_22 = arith.constant 1 : index
    %c0_23 = arith.constant 0 : index
    %c0_24 = arith.constant 0 : index
    %20 = vector.load %arg2[%c1_21, %c1_22, %c0_23, %c0_24] : memref<2x2x16x16xf32, #tpu.memory_space<vmem>>, vector<1x1x16x16xf32>
    %21 = vector.shape_cast %20 : vector<1x1x16x16xf32> to vector<16x16xf32>
    %cst_25 = arith.constant dense<0.000000e+00> : vector<16x16xf32>
    %22 = tpu.matmul %21, %3, %cst_25 {dimension_numbers = #tpu.dot_dimension_numbers<[1], [0], [0], [1], [0, 0, 1, 1], [], []>} : vector<16x16xf32>, vector<16x16xf32>, vector<16x16xf32> -> vector<16x16xf32>
    %23 = arith.addf %19, %22 : vector<16x16xf32>
    %c1_26 = arith.constant 1 : index
    %c0_27 = arith.constant 0 : index
    %c0_28 = arith.constant 0 : index
    %24 = vector.load %arg3[%c1_26, %c0_27, %c0_28] : memref<2x16x1xf32, #tpu.memory_space<vmem>>, vector<1x16x1xf32>
    %25 = vector.shape_cast %24 : vector<1x16x1xf32> to vector<16x1xf32>
    %26 = vector.broadcast %25 : vector<16x1xf32> to vector<16x16xf32>
    %27 = arith.addf %23, %26 : vector<16x16xf32>
    %cst_29 = arith.constant 0.000000e+00 : f32
    %28 = vector.broadcast %cst_29 : f32 to vector<16x16xf32>
    %29 = arith.maximumf %27, %28 : vector<16x16xf32>
    %c0_30 = arith.constant 0 : index
    %c0_31 = arith.constant 0 : index
    %c0_32 = arith.constant 0 : index
    %c0_33 = arith.constant 0 : index
    %30 = vector.load %arg4[%c0_30, %c0_31, %c0_32, %c0_33] : memref<2x2x16x16xf32, #tpu.memory_space<vmem>>, vector<1x1x16x16xf32>
    %31 = vector.shape_cast %30 : vector<1x1x16x16xf32> to vector<16x16xf32>
    %cst_34 = arith.constant dense<0.000000e+00> : vector<16x16xf32>
    %32 = tpu.matmul %31, %16, %cst_34 {dimension_numbers = #tpu.dot_dimension_numbers<[1], [1], [0], [0], [0, 0, 1, 0], [], []>} : vector<16x16xf32>, vector<16x16xf32>, vector<16x16xf32> -> vector<16x16xf32>
    %c0_35 = arith.constant 0 : index
    %c1_36 = arith.constant 1 : index
    %c0_37 = arith.constant 0 : index
    %c0_38 = arith.constant 0 : index
    %33 = vector.load %arg4[%c0_35, %c1_36, %c0_37, %c0_38] : memref<2x2x16x16xf32, #tpu.memory_space<vmem>>, vector<1x1x16x16xf32>
    %34 = vector.shape_cast %33 : vector<1x1x16x16xf32> to vector<16x16xf32>
    %cst_39 = arith.constant dense<0.000000e+00> : vector<16x16xf32>
    %35 = tpu.matmul %34, %29, %cst_39 {dimension_numbers = #tpu.dot_dimension_numbers<[1], [1], [0], [0], [0, 0, 1, 0], [], []>} : vector<16x16xf32>, vector<16x16xf32>, vector<16x16xf32> -> vector<16x16xf32>
    %36 = arith.addf %32, %35 : vector<16x16xf32>
    %c0_40 = arith.constant 0 : index
    %c0_41 = arith.constant 0 : index
    %c0_42 = arith.constant 0 : index
    %37 = vector.load %arg5[%c0_40, %c0_41, %c0_42] : memref<2x16x1xf32, #tpu.memory_space<vmem>>, vector<1x16x1xf32>
    %38 = vector.shape_cast %37 : vector<1x16x1xf32> to vector<16x1xf32>
    %39 = vector.broadcast %38 : vector<16x1xf32> to vector<16x16xf32>
    %40 = arith.addf %36, %39 : vector<16x16xf32>
    %41 = math.tanh %40 : vector<16x16xf32>
    %c1_43 = arith.constant 1 : index
    %c0_44 = arith.constant 0 : index
    %c0_45 = arith.constant 0 : index
    %c0_46 = arith.constant 0 : index
    %42 = vector.load %arg4[%c1_43, %c0_44, %c0_45, %c0_46] : memref<2x2x16x16xf32, #tpu.memory_space<vmem>>, vector<1x1x16x16xf32>
    %43 = vector.shape_cast %42 : vector<1x1x16x16xf32> to vector<16x16xf32>
    %cst_47 = arith.constant dense<0.000000e+00> : vector<16x16xf32>
    %44 = tpu.matmul %43, %16, %cst_47 {dimension_numbers = #tpu.dot_dimension_numbers<[1], [1], [0], [0], [0, 0, 1, 0], [], []>} : vector<16x16xf32>, vector<16x16xf32>, vector<16x16xf32> -> vector<16x16xf32>
    %c1_48 = arith.constant 1 : index
    %c1_49 = arith.constant 1 : index
    %c0_50 = arith.constant 0 : index
    %c0_51 = arith.constant 0 : index
    %45 = vector.load %arg4[%c1_48, %c1_49, %c0_50, %c0_51] : memref<2x2x16x16xf32, #tpu.memory_space<vmem>>, vector<1x1x16x16xf32>
    %46 = vector.shape_cast %45 : vector<1x1x16x16xf32> to vector<16x16xf32>
    %cst_52 = arith.constant dense<0.000000e+00> : vector<16x16xf32>
    %47 = tpu.matmul %46, %29, %cst_52 {dimension_numbers = #tpu.dot_dimension_numbers<[1], [1], [0], [0], [0, 0, 1, 0], [], []>} : vector<16x16xf32>, vector<16x16xf32>, vector<16x16xf32> -> vector<16x16xf32>
    %48 = arith.addf %44, %47 : vector<16x16xf32>
    %c1_53 = arith.constant 1 : index
    %c0_54 = arith.constant 0 : index
    %c0_55 = arith.constant 0 : index
    %49 = vector.load %arg5[%c1_53, %c0_54, %c0_55] : memref<2x16x1xf32, #tpu.memory_space<vmem>>, vector<1x16x1xf32>
    %50 = vector.shape_cast %49 : vector<1x16x1xf32> to vector<16x1xf32>
    %51 = vector.broadcast %50 : vector<16x1xf32> to vector<16x16xf32>
    %52 = arith.addf %48, %51 : vector<16x16xf32>
    %53 = math.tanh %52 : vector<16x16xf32>
    %c0_56 = arith.constant 0 : index
    %c0_57 = arith.constant 0 : index
    %c0_58 = arith.constant 0 : index
    %c0_59 = arith.constant 0 : index
    %54 = vector.load %arg6[%c0_56, %c0_57, %c0_58, %c0_59] : memref<2x2x16x16xf32, #tpu.memory_space<vmem>>, vector<1x1x16x16xf32>
    %55 = vector.shape_cast %54 : vector<1x1x16x16xf32> to vector<16x16xf32>
    %cst_60 = arith.constant dense<0.000000e+00> : vector<16x16xf32>
    %56 = tpu.matmul %55, %41, %cst_60 {dimension_numbers = #tpu.dot_dimension_numbers<[1], [1], [0], [0], [0, 0, 1, 0], [], []>} : vector<16x16xf32>, vector<16x16xf32>, vector<16x16xf32> -> vector<16x16xf32>
    %c0_61 = arith.constant 0 : index
    %c1_62 = arith.constant 1 : index
    %c0_63 = arith.constant 0 : index
    %c0_64 = arith.constant 0 : index
    %57 = vector.load %arg6[%c0_61, %c1_62, %c0_63, %c0_64] : memref<2x2x16x16xf32, #tpu.memory_space<vmem>>, vector<1x1x16x16xf32>
    %58 = vector.shape_cast %57 : vector<1x1x16x16xf32> to vector<16x16xf32>
    %cst_65 = arith.constant dense<0.000000e+00> : vector<16x16xf32>
    %59 = tpu.matmul %58, %53, %cst_65 {dimension_numbers = #tpu.dot_dimension_numbers<[1], [1], [0], [0], [0, 0, 1, 0], [], []>} : vector<16x16xf32>, vector<16x16xf32>, vector<16x16xf32> -> vector<16x16xf32>
    %60 = arith.addf %56, %59 : vector<16x16xf32>
    %c0_66 = arith.constant 0 : index
    %c0_67 = arith.constant 0 : index
    %c0_68 = arith.constant 0 : index
    %61 = vector.load %arg7[%c0_66, %c0_67, %c0_68] : memref<2x16x1xf32, #tpu.memory_space<vmem>>, vector<1x16x1xf32>
    %62 = vector.shape_cast %61 : vector<1x16x1xf32> to vector<16x1xf32>
    %63 = vector.broadcast %62 : vector<16x1xf32> to vector<16x16xf32>
    %64 = arith.addf %60, %63 : vector<16x16xf32>
    %cst_69 = arith.constant 0.000000e+00 : f32
    %65 = vector.broadcast %cst_69 : f32 to vector<16x16xf32>
    %66 = arith.maximumf %64, %65 : vector<16x16xf32>
    %c1_70 = arith.constant 1 : index
    %c0_71 = arith.constant 0 : index
    %c0_72 = arith.constant 0 : index
    %c0_73 = arith.constant 0 : index
    %67 = vector.load %arg6[%c1_70, %c0_71, %c0_72, %c0_73] : memref<2x2x16x16xf32, #tpu.memory_space<vmem>>, vector<1x1x16x16xf32>
    %68 = vector.shape_cast %67 : vector<1x1x16x16xf32> to vector<16x16xf32>
    %cst_74 = arith.constant dense<0.000000e+00> : vector<16x16xf32>
    %69 = tpu.matmul %68, %41, %cst_74 {dimension_numbers = #tpu.dot_dimension_numbers<[1], [1], [0], [0], [0, 0, 1, 0], [], []>} : vector<16x16xf32>, vector<16x16xf32>, vector<16x16xf32> -> vector<16x16xf32>
    %c1_75 = arith.constant 1 : index
    %c1_76 = arith.constant 1 : index
    %c0_77 = arith.constant 0 : index
    %c0_78 = arith.constant 0 : index
    %70 = vector.load %arg6[%c1_75, %c1_76, %c0_77, %c0_78] : memref<2x2x16x16xf32, #tpu.memory_space<vmem>>, vector<1x1x16x16xf32>
    %71 = vector.shape_cast %70 : vector<1x1x16x16xf32> to vector<16x16xf32>
    %cst_79 = arith.constant dense<0.000000e+00> : vector<16x16xf32>
    %72 = tpu.matmul %71, %53, %cst_79 {dimension_numbers = #tpu.dot_dimension_numbers<[1], [1], [0], [0], [0, 0, 1, 0], [], []>} : vector<16x16xf32>, vector<16x16xf32>, vector<16x16xf32> -> vector<16x16xf32>
    %73 = arith.addf %69, %72 : vector<16x16xf32>
    %c1_80 = arith.constant 1 : index
    %c0_81 = arith.constant 0 : index
    %c0_82 = arith.constant 0 : index
    %74 = vector.load %arg7[%c1_80, %c0_81, %c0_82] : memref<2x16x1xf32, #tpu.memory_space<vmem>>, vector<1x16x1xf32>
    %75 = vector.shape_cast %74 : vector<1x16x1xf32> to vector<16x1xf32>
    %76 = vector.broadcast %75 : vector<16x1xf32> to vector<16x16xf32>
    %77 = arith.addf %73, %76 : vector<16x16xf32>
    %cst_83 = arith.constant 0.000000e+00 : f32
    %78 = vector.broadcast %cst_83 : f32 to vector<16x16xf32>
    %79 = arith.maximumf %77, %78 : vector<16x16xf32>
    %c0_84 = arith.constant 0 : index
    %c0_85 = arith.constant 0 : index
    %c0_86 = arith.constant 0 : index
    %c0_87 = arith.constant 0 : index
    %80 = vector.load %arg8[%c0_84, %c0_85, %c0_86, %c0_87] : memref<2x2x16x16xf32, #tpu.memory_space<vmem>>, vector<1x1x16x16xf32>
    %81 = vector.shape_cast %80 : vector<1x1x16x16xf32> to vector<16x16xf32>
    %cst_88 = arith.constant dense<0.000000e+00> : vector<16x16xf32>
    %82 = tpu.matmul %66, %81, %cst_88 {dimension_numbers = #tpu.dot_dimension_numbers<[1], [1], [0], [0], [0, 0, 1, 0], [], []>} : vector<16x16xf32>, vector<16x16xf32>, vector<16x16xf32> -> vector<16x16xf32>
    %c0_89 = arith.constant 0 : index
    %c1_90 = arith.constant 1 : index
    %c0_91 = arith.constant 0 : index
    %c0_92 = arith.constant 0 : index
    %83 = vector.load %arg8[%c0_89, %c1_90, %c0_91, %c0_92] : memref<2x2x16x16xf32, #tpu.memory_space<vmem>>, vector<1x1x16x16xf32>
    %84 = vector.shape_cast %83 : vector<1x1x16x16xf32> to vector<16x16xf32>
    %cst_93 = arith.constant dense<0.000000e+00> : vector<16x16xf32>
    %85 = tpu.matmul %79, %84, %cst_93 {dimension_numbers = #tpu.dot_dimension_numbers<[1], [1], [0], [0], [0, 0, 1, 0], [], []>} : vector<16x16xf32>, vector<16x16xf32>, vector<16x16xf32> -> vector<16x16xf32>
    %86 = arith.addf %82, %85 : vector<16x16xf32>
    %c0_94 = arith.constant 0 : index
    %c0_95 = arith.constant 0 : index
    %c0_96 = arith.constant 0 : index
    %87 = vector.load %arg9[%c0_94, %c0_95, %c0_96] : memref<2x1x16xf32, #tpu.memory_space<vmem>>, vector<1x1x16xf32>
    %88 = vector.shape_cast %87 : vector<1x1x16xf32> to vector<1x16xf32>
    %89 = vector.broadcast %88 : vector<1x16xf32> to vector<16x16xf32>
    %90 = arith.addf %86, %89 : vector<16x16xf32>
    %91 = math.tanh %90 : vector<16x16xf32>
    %c0_97 = arith.constant 0 : index
    %c0_98 = arith.constant 0 : index
    %c0_99 = arith.constant 0 : index
    %92 = vector.load %arg10[%c0_97, %c0_98, %c0_99] : memref<1x32x16xf32, #tpu.memory_space<vmem>>, vector<1x16x16xf32>
    %93 = vector.shape_cast %92 : vector<1x16x16xf32> to vector<16x16xf32>
    %94 = vector.shape_cast %91 : vector<16x16xf32> to vector<1x16x16xf32>
    tpu.vector_store %arg10[%c0_97, %c0_98, %c0_99], %94 {strides = array<i32>} : memref<1x32x16xf32, #tpu.memory_space<vmem>>, vector<1x16x16xf32>,
    %c1_100 = arith.constant 1 : index
    %c0_101 = arith.constant 0 : index
    %c0_102 = arith.constant 0 : index
    %c0_103 = arith.constant 0 : index
    %95 = vector.load %arg8[%c1_100, %c0_101, %c0_102, %c0_103] : memref<2x2x16x16xf32, #tpu.memory_space<vmem>>, vector<1x1x16x16xf32>
    %96 = vector.shape_cast %95 : vector<1x1x16x16xf32> to vector<16x16xf32>
    %cst_104 = arith.constant dense<0.000000e+00> : vector<16x16xf32>
    %97 = tpu.matmul %66, %96, %cst_104 {dimension_numbers = #tpu.dot_dimension_numbers<[1], [1], [0], [0], [0, 0, 1, 0], [], []>} : vector<16x16xf32>, vector<16x16xf32>, vector<16x16xf32> -> vector<16x16xf32>
    %c1_105 = arith.constant 1 : index
    %c1_106 = arith.constant 1 : index
    %c0_107 = arith.constant 0 : index
    %c0_108 = arith.constant 0 : index
    %98 = vector.load %arg8[%c1_105, %c1_106, %c0_107, %c0_108] : memref<2x2x16x16xf32, #tpu.memory_space<vmem>>, vector<1x1x16x16xf32>
    %99 = vector.shape_cast %98 : vector<1x1x16x16xf32> to vector<16x16xf32>
    %cst_109 = arith.constant dense<0.000000e+00> : vector<16x16xf32>
    %100 = tpu.matmul %79, %99, %cst_109 {dimension_numbers = #tpu.dot_dimension_numbers<[1], [1], [0], [0], [0, 0, 1, 0], [], []>} : vector<16x16xf32>, vector<16x16xf32>, vector<16x16xf32> -> vector<16x16xf32>
    %101 = arith.addf %97, %100 : vector<16x16xf32>
    %c1_110 = arith.constant 1 : index
    %c0_111 = arith.constant 0 : index
    %c0_112 = arith.constant 0 : index
    %102 = vector.load %arg9[%c1_110, %c0_111, %c0_112] : memref<2x1x16xf32, #tpu.memory_space<vmem>>, vector<1x1x16xf32>
    %103 = vector.shape_cast %102 : vector<1x1x16xf32> to vector<1x16xf32>
    %104 = vector.broadcast %103 : vector<1x16xf32> to vector<16x16xf32>
    %105 = arith.addf %101, %104 : vector<16x16xf32>
    %106 = math.tanh %105 : vector<16x16xf32>
    %c0_113 = arith.constant 0 : index
    %c16_114 = arith.constant 16 : index
    %c0_115 = arith.constant 0 : index
    %107 = vector.load %arg10[%c0_113, %c16_114, %c0_115] : memref<1x32x16xf32, #tpu.memory_space<vmem>>, vector<1x16x16xf32>
    %108 = vector.shape_cast %107 : vector<1x16x16xf32> to vector<16x16xf32>
    %109 = vector.shape_cast %106 : vector<16x16xf32> to vector<1x16x16xf32>
    tpu.vector_store %arg10[%c0_113, %c16_114, %c0_115], %109 {strides = array<i32>} : memref<1x32x16xf32, #tpu.memory_space<vmem>>, vector<1x16x16xf32>,
    return
  }
  func.func @transform_0(%arg0: i32) -> (i32, i32, i32) {
    %c0_i32 = arith.constant 0 : i32
    %c0_i32_0 = arith.constant 0 : i32
    %c0_i32_1 = arith.constant 0 : i32
    return %arg0, %c0_i32, %c0_i32_0 : i32, i32, i32
  }
  func.func @transform_1(%arg0: i32) -> (i32, i32, i32, i32) {
    %c0_i32 = arith.constant 0 : i32
    %c0_i32_0 = arith.constant 0 : i32
    %c0_i32_1 = arith.constant 0 : i32
    %c0_i32_2 = arith.constant 0 : i32
    %c0_i32_3 = arith.constant 0 : i32
    return %c0_i32, %c0_i32_0, %c0_i32_1, %c0_i32_2 : i32, i32, i32, i32
  }
  func.func @transform_2(%arg0: i32) -> (i32, i32, i32) {
    %c0_i32 = arith.constant 0 : i32
    %c0_i32_0 = arith.constant 0 : i32
    %c0_i32_1 = arith.constant 0 : i32
    %c0_i32_2 = arith.constant 0 : i32
    return %c0_i32, %c0_i32_0, %c0_i32_1 : i32, i32, i32
  }
  func.func @transform_3(%arg0: i32) -> (i32, i32, i32, i32) {
    %c0_i32 = arith.constant 0 : i32
    %c0_i32_0 = arith.constant 0 : i32
    %c0_i32_1 = arith.constant 0 : i32
    %c0_i32_2 = arith.constant 0 : i32
    %c0_i32_3 = arith.constant 0 : i32
    return %c0_i32, %c0_i32_0, %c0_i32_1, %c0_i32_2 : i32, i32, i32, i32
  }
  func.func @transform_4(%arg0: i32) -> (i32, i32, i32) {
    %c0_i32 = arith.constant 0 : i32
    %c0_i32_0 = arith.constant 0 : i32
    %c0_i32_1 = arith.constant 0 : i32
    %c0_i32_2 = arith.constant 0 : i32
    return %c0_i32, %c0_i32_0, %c0_i32_1 : i32, i32, i32
  }
  func.func @transform_5(%arg0: i32) -> (i32, i32, i32, i32) {
    %c0_i32 = arith.constant 0 : i32
    %c0_i32_0 = arith.constant 0 : i32
    %c0_i32_1 = arith.constant 0 : i32
    %c0_i32_2 = arith.constant 0 : i32
    %c0_i32_3 = arith.constant 0 : i32
    return %c0_i32, %c0_i32_0, %c0_i32_1, %c0_i32_2 : i32, i32, i32, i32
  }
  func.func @transform_6(%arg0: i32) -> (i32, i32, i32) {
    %c0_i32 = arith.constant 0 : i32
    %c0_i32_0 = arith.constant 0 : i32
    %c0_i32_1 = arith.constant 0 : i32
    %c0_i32_2 = arith.constant 0 : i32
    return %c0_i32, %c0_i32_0, %c0_i32_1 : i32, i32, i32
  }
  func.func @transform_7(%arg0: i32) -> (i32, i32, i32, i32) {
    %c0_i32 = arith.constant 0 : i32
    %c0_i32_0 = arith.constant 0 : i32
    %c0_i32_1 = arith.constant 0 : i32
    %c0_i32_2 = arith.constant 0 : i32
    %c0_i32_3 = arith.constant 0 : i32
    return %c0_i32, %c0_i32_0, %c0_i32_1, %c0_i32_2 : i32, i32, i32, i32
  }
  func.func @transform_8(%arg0: i32) -> (i32, i32, i32) {
    %c0_i32 = arith.constant 0 : i32
    %c0_i32_0 = arith.constant 0 : i32
    %c0_i32_1 = arith.constant 0 : i32
    %c0_i32_2 = arith.constant 0 : i32
    return %c0_i32, %c0_i32_0, %c0_i32_1 : i32, i32, i32
  }
  func.func @transform_9(%arg0: i32) -> (i32, i32, i32) {
    %c0_i32 = arith.constant 0 : i32
    %c0_i32_0 = arith.constant 0 : i32
    %c0_i32_1 = arith.constant 0 : i32
    return %arg0, %c0_i32, %c0_i32_0 : i32, i32, i32
  }
}

</mosaic_0001>

<llo_original>
// kernel: tpu_custom_call.1
$region0: #{tpu_custom_call.1}
  #allocation0 [shape = 'u32[]', space=smem, size = 0x4, offset = 0x4, fixed_abs, tag = 'smem constant byte address 0x4 - core index']
  #allocation1 [shape = 'u32[144,128]{1,0:T(1,128)}', space=vmem, size = 0x12000, scoped, tag = 'internal scratch']
  %s0 = inlined_call_operand.vmem [shape: f32[2,32,16], index: 0, kind: input, shape index: {}]
  %s1 = inlined_call_operand.vmem [shape: f32[2,2,16,16], index: 1, kind: input, shape index: {}]
  %s2 = inlined_call_operand.vmem [shape: f32[2,16,1], index: 2, kind: input, shape index: {}]
  %s3 = inlined_call_operand.vmem [shape: f32[2,2,16,16], index: 3, kind: input, shape index: {}]
  %s4 = inlined_call_operand.vmem [shape: f32[2,16,1], index: 4, kind: input, shape index: {}]
  %s5 = inlined_call_operand.vmem [shape: f32[2,2,16,16], index: 5, kind: input, shape index: {}]
  %s6 = inlined_call_operand.vmem [shape: f32[2,16,1], index: 6, kind: input, shape index: {}]
  %s7 = inlined_call_operand.hbm [shape: f32[2,2,16,16], index: 7, kind: input, shape index: {}]
  %s8 = inlined_call_operand.vmem [shape: f32[2,1,16], index: 8, kind: input, shape index: {}]
  %s9 = inlined_call_operand.vmem [shape: f32[2,32,16], index: 9, kind: output, shape index: {}]
  %s10 = sld [smem:[#allocation0]]
  $region73: #{tpu_custom_call.1} parent=0
    _
  %s12 = ssub.s32 1, %s10
  %s13 = scalar_select 0, %s12, %s10
  $region1: #{tpu_custom_call.1} parent=0
    #allocation2 [shape = 'u8[32768]{0}', space=vmem, size = 0x8000, scoped, tag = 'input window, operand 7, single buffered']
    #allocation3 [shape = 's32[2]{0}', space=sflag, size = 0x8, scoped, tag = 'scoped memory for tpu_custom_call.1']
    %14 = vsyncpa [#allocation3], 0
    loop: start=0, step=1, limit=4
    $region2: #{tpu_custom_call.1} parent=1 // loop_pre_header
      _
    $region3: #{tpu_custom_call.1} parent=1 // loop_header
      %s16 = sphi 0, %s20
      %p17 = scmp.ge.s32.totalorder %s16, 4
      %s26 = sphi 0, %s28
      %s29 = sphi 0, %s26
      %s30 = sphi 0, %s29
      %s46 = sphi 0, %s30
      %s50 = sphi 0, %s50
      %s52 = sphi 0, %s50
      %s53 = sphi 0, %s52
      %s67 = sphi 0, %s53
      %s71 = sphi 0, %s71
      %s73 = sphi 0, %s71
      %s74 = sphi 0, %s73
      %s88 = sphi 0, %s74
      %s92 = sphi 0, %s92
      %s94 = sphi 0, %s92
      %s95 = sphi 0, %s94
      %s109 = sphi 0, %s95
      %s113 = sphi 0, %s113
      %s115 = sphi 0, %s113
      %s116 = sphi 0, %s115
      %s130 = sphi 0, %s116
      %s134 = sphi 0, %s134
      %s136 = sphi 0, %s134
      %s137 = sphi 0, %s136
      %s151 = sphi 0, %s137
      %s155 = sphi 0, %s155
      %s157 = sphi 0, %s155
      %s158 = sphi 0, %s157
      %s172 = sphi 0, %s158
      %s176 = sphi 0, %s176
      %s178 = sphi 0, %s176
      %s179 = sphi 0, %s178
      %s193 = sphi 0, %s179
      %s197 = sphi 0, %s197
      %s199 = sphi 0, %s197
      %s200 = sphi 0, %s199
      %s214 = sphi 0, %s200
      %s220 = sphi 0, %s222
      %s223 = sphi 0, %s220
      %s224 = sphi 0, %s223
      %s240 = sphi 0, %s224
    $region4: #{tpu_custom_call.1} parent=1 // loop_header_branch
      %19 = sbr.rel (%p17) target = $region8
    $region5: #{tpu_custom_call.1} parent=1 // loop_body
      %s21 = ssub.s32 %s16, 1
      %s22 = ssub.s32 %s16, 2
      %s23 = sadd.s32 %s16, 1
      %s24 = ssub.s32 %s16, %s23
      %p25 = scmp.eq.s32.totalorder %s24, 0
      %s27 = sadd.s32 %s26, 1
      %s28 = scalar_select %p25, %s26, %s27
      %p31 = pneg %p25
      %p32 = scmp.eq.s32.totalorder %s16, 1
      %p33 = por %p31, %p32
      %p34 = scmp.ne.s32.totalorder %s26, %s29
      %p35 = scmp.eq.s32.totalorder %s16, 0
      %p36 = por %p34, %p35
      %p37 = scmp.ne.s32.totalorder %s26, %s29
      %p38 = scmp.eq.s32.totalorder %s21, 1
      %p39 = por %p37, %p38
      %p40 = scmp.ne.s32.totalorder %s29, %s30
      %p41 = scmp.eq.s32.totalorder %s21, 0
      %p42 = por %p40, %p41
      %p43 = scmp.ne.s32.totalorder %s29, %s30
      %p44 = scmp.eq.s32.totalorder %s22, 1
      %p45 = por %p43, %p44
      %p47 = scmp.ne.s32.totalorder %s30, %s46
      %p48 = scmp.eq.s32.totalorder %s22, 0
      %p49 = por %p47, %p48
      %s51 = sadd.s32 %s50, 1
      %p54 = scmp.eq.s32.totalorder %s16, 1
      %p55 = scmp.ne.s32.totalorder %s50, %s52
      %p56 = scmp.eq.s32.totalorder %s16, 0
      %p57 = por %p55, %p56
      %p58 = scmp.ne.s32.totalorder %s50, %s52
      %p59 = scmp.eq.s32.totalorder %s21, 1
      %p60 = por %p58, %p59
      %p61 = scmp.ne.s32.totalorder %s52, %s53
      %p62 = scmp.eq.s32.totalorder %s21, 0
      %p63 = por %p61, %p62
      %p64 = scmp.ne.s32.totalorder %s52, %s53
      %p65 = scmp.eq.s32.totalorder %s22, 1
      %p66 = por %p64, %p65
      %p68 = scmp.ne.s32.totalorder %s53, %s67
      %p69 = scmp.eq.s32.totalorder %s22, 0
      %p70 = por %p68, %p69
      %s72 = sadd.s32 %s71, 1
      %p75 = scmp.eq.s32.totalorder %s16, 1
      %p76 = scmp.ne.s32.totalorder %s71, %s73
      %p77 = scmp.eq.s32.totalorder %s16, 0
      %p78 = por %p76, %p77
      %p79 = scmp.ne.s32.totalorder %s71, %s73
      %p80 = scmp.eq.s32.totalorder %s21, 1
      %p81 = por %p79, %p80
      %p82 = scmp.ne.s32.totalorder %s73, %s74
      %p83 = scmp.eq.s32.totalorder %s21, 0
      %p84 = por %p82, %p83
      %p85 = scmp.ne.s32.totalorder %s73, %s74
      %p86 = scmp.eq.s32.totalorder %s22, 1
      %p87 = por %p85, %p86
      %p89 = scmp.ne.s32.totalorder %s74, %s88
      %p90 = scmp.eq.s32.totalorder %s22, 0
      %p91 = por %p89, %p90
      %s93 = sadd.s32 %s92, 1
      %p96 = scmp.eq.s32.totalorder %s16, 1
      %p97 = scmp.ne.s32.totalorder %s92, %s94
      %p98 = scmp.eq.s32.totalorder %s16, 0
      %p99 = por %p97, %p98
      %p100 = scmp.ne.s32.totalorder %s92, %s94
      %p101 = scmp.eq.s32.totalorder %s21, 1
      %p102 = por %p100, %p101
      %p103 = scmp.ne.s32.totalorder %s94, %s95
      %p104 = scmp.eq.s32.totalorder %s21, 0
      %p105 = por %p103, %p104
      %p106 = scmp.ne.s32.totalorder %s94, %s95
      %p107 = scmp.eq.s32.totalorder %s22, 1
      %p108 = por %p106, %p107
      %p110 = scmp.ne.s32.totalorder %s95, %s109
      %p111 = scmp.eq.s32.totalorder %s22, 0
      %p112 = por %p110, %p111
      %s114 = sadd.s32 %s113, 1
      %p117 = scmp.eq.s32.totalorder %s16, 1
      %p118 = scmp.ne.s32.totalorder %s113, %s115
      %p119 = scmp.eq.s32.totalorder %s16, 0
      %p120 = por %p118, %p119
      %p121 = scmp.ne.s32.totalorder %s113, %s115
      %p122 = scmp.eq.s32.totalorder %s21, 1
      %p123 = por %p121, %p122
      %p124 = scmp.ne.s32.totalorder %s115, %s116
      %p125 = scmp.eq.s32.totalorder %s21, 0
      %p126 = por %p124, %p125
      %p127 = scmp.ne.s32.totalorder %s115, %s116
      %p128 = scmp.eq.s32.totalorder %s22, 1
      %p129 = por %p127, %p128
      %p131 = scmp.ne.s32.totalorder %s116, %s130
      %p132 = scmp.eq.s32.totalorder %s22, 0
      %p133 = por %p131, %p132
      %s135 = sadd.s32 %s134, 1
      %p138 = scmp.eq.s32.totalorder %s16, 1
      %p139 = scmp.ne.s32.totalorder %s134, %s136
      %p140 = scmp.eq.s32.totalorder %s16, 0
      %p141 = por %p139, %p140
      %p142 = scmp.ne.s32.totalorder %s134, %s136
      %p143 = scmp.eq.s32.totalorder %s21, 1
      %p144 = por %p142, %p143
      %p145 = scmp.ne.s32.totalorder %s136, %s137
      %p146 = scmp.eq.s32.totalorder %s21, 0
      %p147 = por %p145, %p146
      %p148 = scmp.ne.s32.totalorder %s136, %s137
      %p149 = scmp.eq.s32.totalorder %s22, 1
      %p150 = por %p148, %p149
      %p152 = scmp.ne.s32.totalorder %s137, %s151
      %p153 = scmp.eq.s32.totalorder %s22, 0
      %p154 = por %p152, %p153
      %s156 = sadd.s32 %s155, 1
      %p159 = scmp.eq.s32.totalorder %s16, 1
      %p160 = scmp.ne.s32.totalorder %s155, %s157
      %p161 = scmp.eq.s32.totalorder %s16, 0
      %p162 = por %p160, %p161
      %p163 = scmp.ne.s32.totalorder %s155, %s157
      %p164 = scmp.eq.s32.totalorder %s21, 1
      %p165 = por %p163, %p164
      %p166 = scmp.ne.s32.totalorder %s157, %s158
      %p167 = scmp.eq.s32.totalorder %s21, 0
      %p168 = por %p166, %p167
      %p169 = scmp.ne.s32.totalorder %s157, %s158
      %p170 = scmp.eq.s32.totalorder %s22, 1
      %p171 = por %p169, %p170
      %p173 = scmp.ne.s32.totalorder %s158, %s172
      %p174 = scmp.eq.s32.totalorder %s22, 0
      %p175 = por %p173, %p174
      %s177 = sadd.s32 %s176, 1
      %p180 = scmp.eq.s32.totalorder %s16, 1
      %p181 = scmp.ne.s32.totalorder %s176, %s178
      %p182 = scmp.eq.s32.totalorder %s16, 0
      %p183 = por %p181, %p182
      %p184 = scmp.ne.s32.totalorder %s176, %s178
      %p185 = scmp.eq.s32.totalorder %s21, 1
      %p186 = por %p184, %p185
      %p187 = scmp.ne.s32.totalorder %s178, %s179
      %p188 = scmp.eq.s32.totalorder %s21, 0
      %p189 = por %p187, %p188
      %p190 = scmp.ne.s32.totalorder %s178, %s179
      %p191 = scmp.eq.s32.totalorder %s22, 1
      %p192 = por %p190, %p191
      %p194 = scmp.ne.s32.totalorder %s179, %s193
      %p195 = scmp.eq.s32.totalorder %s22, 0
      %p196 = por %p194, %p195
      %s198 = sadd.s32 %s197, 1
      %p201 = scmp.eq.s32.totalorder %s16, 1
      %p202 = scmp.ne.s32.totalorder %s197, %s199
      %p203 = scmp.eq.s32.totalorder %s16, 0
      %p204 = por %p202, %p203
      %p205 = scmp.ne.s32.totalorder %s197, %s199
      %p206 = scmp.eq.s32.totalorder %s21, 1
      %p207 = por %p205, %p206
      %p208 = scmp.ne.s32.totalorder %s199, %s200
      %p209 = scmp.eq.s32.totalorder %s21, 0
      %p210 = por %p208, %p209
      %p211 = scmp.ne.s32.totalorder %s199, %s200
      %p212 = scmp.eq.s32.totalorder %s22, 1
      %p213 = por %p211, %p212
      %p215 = scmp.ne.s32.totalorder %s200, %s214
      %p216 = scmp.eq.s32.totalorder %s22, 0
      %p217 = por %p215, %p216
      %s218 = ssub.s32 %s16, %s23
      %p219 = scmp.eq.s32.totalorder %s218, 0
      %s221 = sadd.s32 %s220, 1
      %s222 = scalar_select %p219, %s220, %s221
      %p225 = pneg %p219
      %p226 = scmp.eq.s32.totalorder %s16, 1
      %p227 = por %p225, %p226
      %p228 = scmp.ne.s32.totalorder %s220, %s223
      %p229 = scmp.eq.s32.totalorder %s16, 0
      %p230 = por %p228, %p229
      %p231 = scmp.ne.s32.totalorder %s220, %s223
      %p232 = scmp.eq.s32.totalorder %s21, 1
      %p233 = por %p231, %p232
      %p234 = scmp.ne.s32.totalorder %s223, %s224
      %p235 = scmp.eq.s32.totalorder %s21, 0
      %p236 = por %p234, %p235
      %p237 = scmp.ne.s32.totalorder %s223, %s224
      %p238 = scmp.eq.s32.totalorder %s22, 1
      %p239 = por %p237, %p238
      %p241 = scmp.ne.s32.totalorder %s224, %s240
      %p242 = scmp.eq.s32.totalorder %s22, 0
      %p243 = por %p241, %p242
      %p244 = scmp.le.s32.totalorder 1, %s16
      %p245 = scmp.lt.s32.totalorder %s16, 3
      %p246 = pnand %p244, %p245
      %p247 = pneg %p246
      // Predicated region
      $region9: #{tpu_custom_call.1} parent=5 // pred_check
        _
      $region10: #{tpu_custom_call.1} parent=5 // pred_check_branch
        %249 = sbr.rel (%p246) target = $region12
      $region11: #{tpu_custom_call.1} parent=5 // pred_region
        %s250 = ssub.s32 %s16, 1
        // Predicated region
        $region13: #{tpu_custom_call.1} parent=11 // pred_check
          %p251 = pneg %p63
        $region14: #{tpu_custom_call.1} parent=11 // pred_check_branch
          %253 = sbr.rel (%p251) target = $region16
        $region15: #{tpu_custom_call.1} parent=11 // pred_region
          _
        $region16: #{tpu_custom_call.1} parent=11 // pred_fallthru
          _
        // Predicated region
        $region17: #{tpu_custom_call.1} parent=11 // pred_check
          %p254 = pneg %p84
        $region18: #{tpu_custom_call.1} parent=11 // pred_check_branch
          %256 = sbr.rel (%p254) target = $region20
        $region19: #{tpu_custom_call.1} parent=11 // pred_region
          _
        $region20: #{tpu_custom_call.1} parent=11 // pred_fallthru
          _
        // Predicated region
        $region21: #{tpu_custom_call.1} parent=11 // pred_check
          %p257 = pneg %p105
        $region22: #{tpu_custom_call.1} parent=11 // pred_check_branch
          %259 = sbr.rel (%p257) target = $region24
        $region23: #{tpu_custom_call.1} parent=11 // pred_region
          _
        $region24: #{tpu_custom_call.1} parent=11 // pred_fallthru
          _
        // Predicated region
        $region25: #{tpu_custom_call.1} parent=11 // pred_check
          %p260 = pneg %p126
        $region26: #{tpu_custom_call.1} parent=11 // pred_check_branch
          %262 = sbr.rel (%p260) target = $region28
        $region27: #{tpu_custom_call.1} parent=11 // pred_region
          _
        $region28: #{tpu_custom_call.1} parent=11 // pred_fallthru
          _
        // Predicated region
        $region29: #{tpu_custom_call.1} parent=11 // pred_check
          %p263 = pneg %p147
        $region30: #{tpu_custom_call.1} parent=11 // pred_check_branch
          %265 = sbr.rel (%p263) target = $region32
        $region31: #{tpu_custom_call.1} parent=11 // pred_region
          _
        $region32: #{tpu_custom_call.1} parent=11 // pred_fallthru
          _
        // Predicated region
        $region33: #{tpu_custom_call.1} parent=11 // pred_check
          %p266 = pneg %p168
        $region34: #{tpu_custom_call.1} parent=11 // pred_check_branch
          %268 = sbr.rel (%p266) target = $region36
        $region35: #{tpu_custom_call.1} parent=11 // pred_region
          _
        $region36: #{tpu_custom_call.1} parent=11 // pred_fallthru
          _
        // Predicated region
        $region37: #{tpu_custom_call.1} parent=11 // pred_check
          %p269 = pneg %p189
        $region38: #{tpu_custom_call.1} parent=11 // pred_check_branch
          %271 = sbr.rel (%p269) target = $region40
        $region39: #{tpu_custom_call.1} parent=11 // pred_region
          %s273 = ssub.s32 1024, 1024
          %274 = vsyncadd [#allocation3], %s273
          %s275 = sshll.u32 [#allocation2], 4
          %s276 = int_to_ptr.vmem [resolvable:$true] %s275
          %281 = dma.hbm_to_vmem [thread:$0]  %s7, 1024, %s276, [#allocation3], 128, 128, 8
        $region40: #{tpu_custom_call.1} parent=11 // pred_fallthru
          _
        // Predicated region
        $region41: #{tpu_custom_call.1} parent=11 // pred_check
          %p282 = pneg %p210
        $region42: #{tpu_custom_call.1} parent=11 // pred_check_branch
          %284 = sbr.rel (%p282) target = $region44
        $region43: #{tpu_custom_call.1} parent=11 // pred_region
          _
        $region44: #{tpu_custom_call.1} parent=11 // pred_fallthru
          _
      $region12: #{tpu_custom_call.1} parent=5 // pred_fallthru
        _
      %p285 = scmp.lt.s32.totalorder %s16, 2
      // Predicated region
      $region45: #{tpu_custom_call.1} parent=5 // pred_check
        %p286 = pneg %p285
      $region46: #{tpu_custom_call.1} parent=5 // pred_check_branch
        %288 = sbr.rel (%p286) target = $region48
      $region47: #{tpu_custom_call.1} parent=5 // pred_region
        // Predicated region
        $region49: #{tpu_custom_call.1} parent=47 // pred_check
          %p289 = pneg %p36
        $region50: #{tpu_custom_call.1} parent=47 // pred_check_branch
          %291 = sbr.rel (%p289) target = $region52
        $region51: #{tpu_custom_call.1} parent=47 // pred_region
          %p292 = scmp.lt.s32.totalorder %s16, 1
          %s293 = scalar_select %p292, %s16, 1
          %s294 = smul.addr %s293, 4
          %s295 = smul.addr %s294, 8
          %s296 = scalar_lea.vmem %s0, %s295
        $region52: #{tpu_custom_call.1} parent=47 // pred_fallthru
          _
      $region48: #{tpu_custom_call.1} parent=5 // pred_fallthru
        _
      %p297 = scmp.le.s32.totalorder 1, %s16
      %p298 = scmp.lt.s32.totalorder %s16, 3
      %p299 = pnand %p297, %p298
      %p300 = pneg %p299
      // Predicated region
      $region53: #{tpu_custom_call.1} parent=5 // pred_check
        _
      $region54: #{tpu_custom_call.1} parent=5 // pred_check_branch
        %302 = sbr.rel (%p299) target = $region56
      $region55: #{tpu_custom_call.1} parent=5 // pred_region
        %s303 = ssub.s32 %s16, 1
        // Predicated region
        $region57: #{tpu_custom_call.1} parent=55 // pred_check
          %p304 = pneg %p189
        $region58: #{tpu_custom_call.1} parent=55 // pred_check_branch
          %306 = sbr.rel (%p304) target = $region60
        $region59: #{tpu_custom_call.1} parent=55 // pred_region
          %307 = dma.done [#allocation3], 1024
        $region60: #{tpu_custom_call.1} parent=55 // pred_fallthru
          _
        %p308 = scmp.lt.s32.totalorder %s21, 1
        %s309 = scalar_select %p308, %s21, 1
        %s310 = smul.addr %s309, 4
        %s311 = smul.addr %s310, 8
        %s312 = scalar_lea.vmem %s0, %s311
        %p313 = pneg %p42
        %p314 = pneg %p39
        %p315 = pneg %p63
        %p316 = pneg %p60
        %p317 = pneg %p84
        %p318 = pneg %p81
        %p319 = pneg %p105
        %p320 = pneg %p102
        %p321 = pneg %p126
        %p322 = pneg %p123
        %p323 = pneg %p147
        %p324 = pneg %p144
        %p325 = pneg %p168
        %p326 = pneg %p165
        %p327 = pneg %p189
        %p328 = pneg %p186
        %p329 = pneg %p210
        %p330 = pneg %p207
        %p331 = pneg %p236
        %p332 = pneg %p233
        %p333 = scmp.lt.s32.totalorder %s21, 1
        %s334 = scalar_select %p333, %s21, 1
        %s335 = smul.addr %s334, 4
        %s336 = smul.addr %s335, 8
        %s337 = scalar_lea.vmem %s9, %s336
        %p338 = scmp.lt.s32.totalorder %s21, 1
        %s339 = scalar_select %p338, %s21, 1
        %s340 = smul.addr %s339, 4
        %s341 = smul.addr %s340, 8
        %s342 = scalar_lea.vmem %s0, %s341
        %p343 = scmp.lt.s32.totalorder %s21, 1
        %s344 = scalar_select %p343, %s21, 1
        %s345 = smul.addr %s344, 4
        %s346 = smul.addr %s345, 8
        %s347 = scalar_lea.vmem %s9, %s346
        %v348 = vld [vmem:[%s342] sm:$0xff]
        %v349 = vld [vmem:[%s342 + $0x8] sm:$0xff]
        %v350 = vld [vmem:[%s342 + $0x10] sm:$0xff]
        %v351 = vld [vmem:[%s342 + $0x18] sm:$0xff]
        %v352 = vld [vmem:[%s1] sm:$0xff]
        %v353 = vld [vmem:[%s1 + $0x8] sm:$0xff]
        %s354 = scalar_lea.vmem %s1, 16
        %v355 = vld [vmem:[%s354] sm:$0xff]
        %v356 = vld [vmem:[%s354 + $0x8] sm:$0xff]
        %vm357 = vcmask 130048
        %v359 = vsel %vm357, %v355, 0
        %v362 = vsel %vm357, %v356, 0
        %364 = vmatprep.subr.mxu0 0.0
        %365 = vmatpush1.msra.mxu0 0.0
        %366 = vmatprep.subr.mxu0 0.0
        %367 = vmatpush1.msra.mxu0 0.0
        %368 = vmatprep.subr.mxu0 0.0
        %369 = vmatpush1.msra.mxu0 0.0
        %370 = vmatprep.subr.mxu0 0.0
        %371 = vmatpush1.msra.mxu0 0.0
        %372 = vmatprep.subr.mxu0 0.0
        %373 = vmatpush1.msra.mxu0 0.0
        %374 = vmatprep.subr.mxu0 0.0
        %375 = vmatpush1.msra.mxu0 0.0
        %376 = vmatprep.subr.mxu0 0.0
        %377 = vmatpush1.msra.mxu0 0.0
        %378 = vmatprep.subr.mxu0 0.0
        %379 = vmatpush1.msra.mxu0 0.0
        %380 = vmatprep.subr.mxu0 0.0
        %381 = vmatpush1.msra.mxu0 0.0
        %382 = vmatprep.subr.mxu0 0.0
        %383 = vmatpush1.msra.mxu0 0.0
        %384 = vmatprep.subr.mxu0 0.0
        %385 = vmatpush1.msra.mxu0 0.0
        %386 = vmatprep.subr.mxu0 0.0
        %387 = vmatpush1.msra.mxu0 0.0
        %388 = vmatprep.subr.mxu0 0.0
        %389 = vmatpush1.msra.mxu0 0.0
        %390 = vmatprep.subr.mxu0 0.0
        %391 = vmatpush1.msra.mxu0 0.0
        %392 = vmatprep.subr.mxu0 0.0
        %393 = vmatpush1.msra.mxu0 %v351
        %394 = vmatprep.subr.mxu0 0.0
        %395 = vmatpush1.msra.mxu0 %v350
        %396 = vmatprep.subr.mxu0 0.0
        %397 = vmatpush2.msra.mxu0 0.0
        %398 = vmatprep.subr.mxu0 0.0
        %399 = vmatpush2.msra.mxu0 0.0
        %400 = vmatprep.subr.mxu0 0.0
        %401 = vmatpush2.msra.mxu0 0.0
        %402 = vmatprep.subr.mxu0 0.0
        %403 = vmatpush2.msra.mxu0 0.0
        %404 = vmatprep.subr.mxu0 0.0
        %405 = vmatpush2.msra.mxu0 0.0
        %406 = vmatprep.subr.mxu0 0.0
        %407 = vmatpush2.msra.mxu0 0.0
        %408 = vmatprep.subr.mxu0 0.0
        %409 = vmatpush2.msra.mxu0 0.0
        %410 = vmatprep.subr.mxu0 0.0
        %411 = vmatpush2.msra.mxu0 0.0
        %412 = vmatprep.subr.mxu0 0.0
        %413 = vmatpush2.msra.mxu0 0.0
        %414 = vmatprep.subr.mxu0 0.0
        %415 = vmatpush2.msra.mxu0 0.0
        %416 = vmatprep.subr.mxu0 0.0
        %417 = vmatpush2.msra.mxu0 0.0
        %418 = vmatprep.subr.mxu0 0.0
        %419 = vmatpush2.msra.mxu0 0.0
        %420 = vmatprep.subr.mxu0 0.0
        %421 = vmatpush2.msra.mxu0 0.0
        %422 = vmatprep.subr.mxu0 0.0
        %423 = vmatpush2.msra.mxu0 0.0
        %424 = vmatprep.subr.mxu0 0.0
        %425 = vmatpush2.msra.mxu0 0.0
        %426 = vmatprep.subr.mxu0 0.0
        %427 = vmatpush2.msra.mxu0 0.0
        %428 = vmatprep.mubr.f32.mxu0 0.0
        %429 = vmatmul.mubr.f32.gmra.mxu0 %v359
        %v430 = vpop.f32.mrf.mxu0
        %v431 = vadd.f32 0.0, %v430
        %v432 = vpop.f32.mrf.mxu0
        %433 = vmatprep.mubr.f32.mxu0 0.0
        %434 = vmatmul.mubr.f32.gmra.mxu0 %v362
        %v435 = vpop.f32.mrf.mxu0
        %v436 = vadd.f32 0.0, %v435
        %v437 = vpop.f32.mrf.mxu0
        %438 = vdwg.mxu0
        %v440 = vsel %vm357, %v352, 0
        %v443 = vsel %vm357, %v353, 0
        %445 = vmatprep.subr.mxu0 0.0
        %446 = vmatpush1.msra.mxu0 0.0
        %447 = vmatprep.subr.mxu0 0.0
        %448 = vmatpush1.msra.mxu0 0.0
        %449 = vmatprep.subr.mxu0 0.0
        %450 = vmatpush1.msra.mxu0 0.0
        %451 = vmatprep.subr.mxu0 0.0
        %452 = vmatpush1.msra.mxu0 0.0
        %453 = vmatprep.subr.mxu0 0.0
        %454 = vmatpush1.msra.mxu0 0.0
        %455 = vmatprep.subr.mxu0 0.0
        %456 = vmatpush1.msra.mxu0 0.0
        %457 = vmatprep.subr.mxu0 0.0
        %458 = vmatpush1.msra.mxu0 0.0
        %459 = vmatprep.subr.mxu0 0.0
        %460 = vmatpush1.msra.mxu0 0.0
        %461 = vmatprep.subr.mxu0 0.0
        %462 = vmatpush1.msra.mxu0 0.0
        %463 = vmatprep.subr.mxu0 0.0
        %464 = vmatpush1.msra.mxu0 0.0
        %465 = vmatprep.subr.mxu0 0.0
        %466 = vmatpush1.msra.mxu0 0.0
        %467 = vmatprep.subr.mxu0 0.0
        %468 = vmatpush1.msra.mxu0 0.0
        %469 = vmatprep.subr.mxu0 0.0
        %470 = vmatpush1.msra.mxu0 0.0
        %471 = vmatprep.subr.mxu0 0.0
        %472 = vmatpush1.msra.mxu0 0.0
        %473 = vmatprep.subr.mxu0 0.0
        %474 = vmatpush1.msra.mxu0 %v349
        %475 = vmatprep.subr.mxu0 0.0
        %476 = vmatpush1.msra.mxu0 %v348
        %477 = vmatprep.subr.mxu0 0.0
        %478 = vmatpush2.msra.mxu0 0.0
        %479 = vmatprep.subr.mxu0 0.0
        %480 = vmatpush2.msra.mxu0 0.0
        %481 = vmatprep.subr.mxu0 0.0
        %482 = vmatpush2.msra.mxu0 0.0
        %483 = vmatprep.subr.mxu0 0.0
        %484 = vmatpush2.msra.mxu0 0.0
        %485 = vmatprep.subr.mxu0 0.0
        %486 = vmatpush2.msra.mxu0 0.0
        %487 = vmatprep.subr.mxu0 0.0
        %488 = vmatpush2.msra.mxu0 0.0
        %489 = vmatprep.subr.mxu0 0.0
        %490 = vmatpush2.msra.mxu0 0.0
        %491 = vmatprep.subr.mxu0 0.0
        %492 = vmatpush2.msra.mxu0 0.0
        %493 = vmatprep.subr.mxu0 0.0
        %494 = vmatpush2.msra.mxu0 0.0
        %495 = vmatprep.subr.mxu0 0.0
        %496 = vmatpush2.msra.mxu0 0.0
        %497 = vmatprep.subr.mxu0 0.0
        %498 = vmatpush2.msra.mxu0 0.0
        %499 = vmatprep.subr.mxu0 0.0
        %500 = vmatpush2.msra.mxu0 0.0
        %501 = vmatprep.subr.mxu0 0.0
        %502 = vmatpush2.msra.mxu0 0.0
        %503 = vmatprep.subr.mxu0 0.0
        %504 = vmatpush2.msra.mxu0 0.0
        %505 = vmatprep.subr.mxu0 0.0
        %506 = vmatpush2.msra.mxu0 0.0
        %507 = vmatprep.subr.mxu0 0.0
        %508 = vmatpush2.msra.mxu0 0.0
        %509 = vmatprep.mubr.f32.mxu0 0.0
        %510 = vmatmul.mubr.f32.gmra.mxu0 %v440
        %v511 = vpop.f32.mrf.mxu0
        %v512 = vadd.f32 %v431, %v511
        %v513 = vpop.f32.mrf.mxu0
        %514 = vmatprep.mubr.f32.mxu0 0.0
        %515 = vmatmul.mubr.f32.gmra.mxu0 %v443
        %v516 = vpop.f32.mrf.mxu0
        %v517 = vadd.f32 %v436, %v516
        %v518 = vpop.f32.mrf.mxu0
        %519 = vdwg.mxu0
        %v520 = vld [vmem:[%s2] sm:$0xff]
        %v521 = vld [vmem:[%s2 + $0x8] sm:$0xff]
        %523 = vset.pattern.permute.xlu0 0
        %524 = vperm.xlu0 %523, %v520
        %v525 = vpop.permute.xlu0 %524
        %528 = vset.pattern.permute.xlu0 0
        %529 = vperm.xlu0 %528, %v521
        %v530 = vpop.permute.xlu0 %529
        %v532 = vadd.f32 %v512, %v525
        %v533 = vadd.f32 %v517, %v530
        %v534 = vmax.f32 %v532, 0.0
        %v535 = vmax.f32 %v533, 0.0
        %s536 = scalar_lea.vmem %s1, 32
        %v537 = vld [vmem:[%s536] sm:$0xff]
        %v538 = vld [vmem:[%s536 + $0x8] sm:$0xff]
        %s539 = scalar_lea.vmem %s1, 48
        %v540 = vld [vmem:[%s539] sm:$0xff]
        %v541 = vld [vmem:[%s539 + $0x8] sm:$0xff]
        %v543 = vsel %vm357, %v540, 0
        %v546 = vsel %vm357, %v541, 0
        %548 = vmatprep.subr.mxu0 0.0
        %549 = vmatpush1.msra.mxu0 0.0
        %550 = vmatprep.subr.mxu0 0.0
        %551 = vmatpush1.msra.mxu0 0.0
        %552 = vmatprep.subr.mxu0 0.0
        %553 = vmatpush1.msra.mxu0 0.0
        %554 = vmatprep.subr.mxu0 0.0
        %555 = vmatpush1.msra.mxu0 0.0
        %556 = vmatprep.subr.mxu0 0.0
        %557 = vmatpush1.msra.mxu0 0.0
        %558 = vmatprep.subr.mxu0 0.0
        %559 = vmatpush1.msra.mxu0 0.0
        %560 = vmatprep.subr.mxu0 0.0
        %561 = vmatpush1.msra.mxu0 0.0
        %562 = vmatprep.subr.mxu0 0.0
        %563 = vmatpush1.msra.mxu0 0.0
        %564 = vmatprep.subr.mxu0 0.0
        %565 = vmatpush1.msra.mxu0 0.0
        %566 = vmatprep.subr.mxu0 0.0
        %567 = vmatpush1.msra.mxu0 0.0
        %568 = vmatprep.subr.mxu0 0.0
        %569 = vmatpush1.msra.mxu0 0.0
        %570 = vmatprep.subr.mxu0 0.0
        %571 = vmatpush1.msra.mxu0 0.0
        %572 = vmatprep.subr.mxu0 0.0
        %573 = vmatpush1.msra.mxu0 0.0
        %574 = vmatprep.subr.mxu0 0.0
        %575 = vmatpush1.msra.mxu0 0.0
        %576 = vmatprep.subr.mxu0 0.0
        %577 = vmatpush1.msra.mxu0 %v351
        %578 = vmatprep.subr.mxu0 0.0
        %579 = vmatpush1.msra.mxu0 %v350
        %580 = vmatprep.subr.mxu0 0.0
        %581 = vmatpush2.msra.mxu0 0.0
        %582 = vmatprep.subr.mxu0 0.0
        %583 = vmatpush2.msra.mxu0 0.0
        %584 = vmatprep.subr.mxu0 0.0
        %585 = vmatpush2.msra.mxu0 0.0
        %586 = vmatprep.subr.mxu0 0.0
        %587 = vmatpush2.msra.mxu0 0.0
        %588 = vmatprep.subr.mxu0 0.0
        %589 = vmatpush2.msra.mxu0 0.0
        %590 = vmatprep.subr.mxu0 0.0
        %591 = vmatpush2.msra.mxu0 0.0
        %592 = vmatprep.subr.mxu0 0.0
        %593 = vmatpush2.msra.mxu0 0.0
        %594 = vmatprep.subr.mxu0 0.0
        %595 = vmatpush2.msra.mxu0 0.0
        %596 = vmatprep.subr.mxu0 0.0
        %597 = vmatpush2.msra.mxu0 0.0
        %598 = vmatprep.subr.mxu0 0.0
        %599 = vmatpush2.msra.mxu0 0.0
        %600 = vmatprep.subr.mxu0 0.0
        %601 = vmatpush2.msra.mxu0 0.0
        %602 = vmatprep.subr.mxu0 0.0
        %603 = vmatpush2.msra.mxu0 0.0
        %604 = vmatprep.subr.mxu0 0.0
        %605 = vmatpush2.msra.mxu0 0.0
        %606 = vmatprep.subr.mxu0 0.0
        %607 = vmatpush2.msra.mxu0 0.0
        %608 = vmatprep.subr.mxu0 0.0
        %609 = vmatpush2.msra.mxu0 0.0
        %610 = vmatprep.subr.mxu0 0.0
        %611 = vmatpush2.msra.mxu0 0.0
        %612 = vmatprep.mubr.f32.mxu0 0.0
        %613 = vmatmul.mubr.f32.gmra.mxu0 %v543
        %v614 = vpop.f32.mrf.mxu0
        %v615 = vadd.f32 0.0, %v614
        %v616 = vpop.f32.mrf.mxu0
        %617 = vmatprep.mubr.f32.mxu0 0.0
        %618 = vmatmul.mubr.f32.gmra.mxu0 %v546
        %v619 = vpop.f32.mrf.mxu0
        %v620 = vadd.f32 0.0, %v619
        %v621 = vpop.f32.mrf.mxu0
        %622 = vdwg.mxu0
        %v624 = vsel %vm357, %v537, 0
        %v627 = vsel %vm357, %v538, 0
        %629 = vmatprep.subr.mxu0 0.0
        %630 = vmatpush1.msra.mxu0 0.0
        %631 = vmatprep.subr.mxu0 0.0
        %632 = vmatpush1.msra.mxu0 0.0
        %633 = vmatprep.subr.mxu0 0.0
        %634 = vmatpush1.msra.mxu0 0.0
        %635 = vmatprep.subr.mxu0 0.0
        %636 = vmatpush1.msra.mxu0 0.0
        %637 = vmatprep.subr.mxu0 0.0
        %638 = vmatpush1.msra.mxu0 0.0
        %639 = vmatprep.subr.mxu0 0.0
        %640 = vmatpush1.msra.mxu0 0.0
        %641 = vmatprep.subr.mxu0 0.0
        %642 = vmatpush1.msra.mxu0 0.0
        %643 = vmatprep.subr.mxu0 0.0
        %644 = vmatpush1.msra.mxu0 0.0
        %645 = vmatprep.subr.mxu0 0.0
        %646 = vmatpush1.msra.mxu0 0.0
        %647 = vmatprep.subr.mxu0 0.0
        %648 = vmatpush1.msra.mxu0 0.0
        %649 = vmatprep.subr.mxu0 0.0
        %650 = vmatpush1.msra.mxu0 0.0
        %651 = vmatprep.subr.mxu0 0.0
        %652 = vmatpush1.msra.mxu0 0.0
        %653 = vmatprep.subr.mxu0 0.0
        %654 = vmatpush1.msra.mxu0 0.0
        %655 = vmatprep.subr.mxu0 0.0
        %656 = vmatpush1.msra.mxu0 0.0
        %657 = vmatprep.subr.mxu0 0.0
        %658 = vmatpush1.msra.mxu0 %v349
        %659 = vmatprep.subr.mxu0 0.0
        %660 = vmatpush1.msra.mxu0 %v348
        %661 = vmatprep.subr.mxu0 0.0
        %662 = vmatpush2.msra.mxu0 0.0
        %663 = vmatprep.subr.mxu0 0.0
        %664 = vmatpush2.msra.mxu0 0.0
        %665 = vmatprep.subr.mxu0 0.0
        %666 = vmatpush2.msra.mxu0 0.0
        %667 = vmatprep.subr.mxu0 0.0
        %668 = vmatpush2.msra.mxu0 0.0
        %669 = vmatprep.subr.mxu0 0.0
        %670 = vmatpush2.msra.mxu0 0.0
        %671 = vmatprep.subr.mxu0 0.0
        %672 = vmatpush2.msra.mxu0 0.0
        %673 = vmatprep.subr.mxu0 0.0
        %674 = vmatpush2.msra.mxu0 0.0
        %675 = vmatprep.subr.mxu0 0.0
        %676 = vmatpush2.msra.mxu0 0.0
        %677 = vmatprep.subr.mxu0 0.0
        %678 = vmatpush2.msra.mxu0 0.0
        %679 = vmatprep.subr.mxu0 0.0
        %680 = vmatpush2.msra.mxu0 0.0
        %681 = vmatprep.subr.mxu0 0.0
        %682 = vmatpush2.msra.mxu0 0.0
        %683 = vmatprep.subr.mxu0 0.0
        %684 = vmatpush2.msra.mxu0 0.0
        %685 = vmatprep.subr.mxu0 0.0
        %686 = vmatpush2.msra.mxu0 0.0
        %687 = vmatprep.subr.mxu0 0.0
        %688 = vmatpush2.msra.mxu0 0.0
        %689 = vmatprep.subr.mxu0 0.0
        %690 = vmatpush2.msra.mxu0 0.0
        %691 = vmatprep.subr.mxu0 0.0
        %692 = vmatpush2.msra.mxu0 0.0
        %693 = vmatprep.mubr.f32.mxu0 0.0
        %694 = vmatmul.mubr.f32.gmra.mxu0 %v624
        %v695 = vpop.f32.mrf.mxu0
        %v696 = vadd.f32 %v615, %v695
        %v697 = vpop.f32.mrf.mxu0
        %698 = vmatprep.mubr.f32.mxu0 0.0
        %699 = vmatmul.mubr.f32.gmra.mxu0 %v627
        %v700 = vpop.f32.mrf.mxu0
        %v701 = vadd.f32 %v620, %v700
        %v702 = vpop.f32.mrf.mxu0
        %703 = vdwg.mxu0
        %s704 = scalar_lea.vmem %s2, 16
        %v705 = vld [vmem:[%s704] sm:$0xff]
        %v706 = vld [vmem:[%s704 + $0x8] sm:$0xff]
        %708 = vset.pattern.permute.xlu0 0
        %709 = vperm.xlu0 %708, %v705
        %v710 = vpop.permute.xlu0 %709
        %713 = vset.pattern.permute.xlu0 0
        %714 = vperm.xlu0 %713, %v706
        %v715 = vpop.permute.xlu0 %714
        %v717 = vadd.f32 %v696, %v710
        %v718 = vadd.f32 %v701, %v715
        %v719 = vmax.f32 %v717, 0.0
        %v720 = vmax.f32 %v718, 0.0
        %v721 = vld [vmem:[%s3] sm:$0xff]
        %v722 = vld [vmem:[%s3 + $0x8] sm:$0xff]
        %s723 = scalar_lea.vmem %s3, 16
        %v724 = vld [vmem:[%s723] sm:$0xff]
        %v725 = vld [vmem:[%s723 + $0x8] sm:$0xff]
        %v727 = vsel %vm357, %v724, 0
        %v730 = vsel %vm357, %v725, 0
        %v733 = vsel %vm357, %v719, 0
        %v736 = vsel %vm357, %v720, 0
        %738 = vmatprep.subr.mxu0 0.0
        %739 = vmatpush1.xpose.msra.mxu0 0.0
        %740 = vmatprep.subr.mxu0 0.0
        %741 = vmatpush1.xpose.msra.mxu0 0.0
        %742 = vmatprep.subr.mxu0 0.0
        %743 = vmatpush1.xpose.msra.mxu0 0.0
        %744 = vmatprep.subr.mxu0 0.0
        %745 = vmatpush1.xpose.msra.mxu0 0.0
        %746 = vmatprep.subr.mxu0 0.0
        %747 = vmatpush1.xpose.msra.mxu0 0.0
        %748 = vmatprep.subr.mxu0 0.0
        %749 = vmatpush1.xpose.msra.mxu0 0.0
        %750 = vmatprep.subr.mxu0 0.0
        %751 = vmatpush1.xpose.msra.mxu0 0.0
        %752 = vmatprep.subr.mxu0 0.0
        %753 = vmatpush1.xpose.msra.mxu0 0.0
        %754 = vmatprep.subr.mxu0 0.0
        %755 = vmatpush1.xpose.msra.mxu0 0.0
        %756 = vmatprep.subr.mxu0 0.0
        %757 = vmatpush1.xpose.msra.mxu0 0.0
        %758 = vmatprep.subr.mxu0 0.0
        %759 = vmatpush1.xpose.msra.mxu0 0.0
        %760 = vmatprep.subr.mxu0 0.0
        %761 = vmatpush1.xpose.msra.mxu0 0.0
        %762 = vmatprep.subr.mxu0 0.0
        %763 = vmatpush1.xpose.msra.mxu0 0.0
        %764 = vmatprep.subr.mxu0 0.0
        %765 = vmatpush1.xpose.msra.mxu0 0.0
        %766 = vmatprep.subr.mxu0 0.0
        %767 = vmatpush1.xpose.msra.mxu0 %v736
        %768 = vmatprep.subr.mxu0 0.0
        %769 = vmatpush1.xpose.msra.mxu0 %v733
        %770 = vmatprep.subr.mxu0 0.0
        %771 = vmatpush2.xpose.msra.mxu0 0.0
        %772 = vmatprep.subr.mxu0 0.0
        %773 = vmatpush2.xpose.msra.mxu0 0.0
        %774 = vmatprep.subr.mxu0 0.0
        %775 = vmatpush2.xpose.msra.mxu0 0.0
        %776 = vmatprep.subr.mxu0 0.0
        %777 = vmatpush2.xpose.msra.mxu0 0.0
        %778 = vmatprep.subr.mxu0 0.0
        %779 = vmatpush2.xpose.msra.mxu0 0.0
        %780 = vmatprep.subr.mxu0 0.0
        %781 = vmatpush2.xpose.msra.mxu0 0.0
        %782 = vmatprep.subr.mxu0 0.0
        %783 = vmatpush2.xpose.msra.mxu0 0.0
        %784 = vmatprep.subr.mxu0 0.0
        %785 = vmatpush2.xpose.msra.mxu0 0.0
        %786 = vmatprep.subr.mxu0 0.0
        %787 = vmatpush2.xpose.msra.mxu0 0.0
        %788 = vmatprep.subr.mxu0 0.0
        %789 = vmatpush2.xpose.msra.mxu0 0.0
        %790 = vmatprep.subr.mxu0 0.0
        %791 = vmatpush2.xpose.msra.mxu0 0.0
        %792 = vmatprep.subr.mxu0 0.0
        %793 = vmatpush2.xpose.msra.mxu0 0.0
        %794 = vmatprep.subr.mxu0 0.0
        %795 = vmatpush2.xpose.msra.mxu0 0.0
        %796 = vmatprep.subr.mxu0 0.0
        %797 = vmatpush2.xpose.msra.mxu0 0.0
        %798 = vmatprep.subr.mxu0 0.0
        %799 = vmatpush2.xpose.msra.mxu0 0.0
        %800 = vmatprep.subr.mxu0 0.0
        %801 = vmatpush2.xpose.msra.mxu0 0.0
        %802 = vmatprep.mubr.f32.mxu0 0.0
        %803 = vmatmul.mubr.f32.gmra.mxu0 %v727
        %v804 = vpop.f32.mrf.mxu0
        %v805 = vadd.f32 0.0, %v804
        %v806 = vpop.f32.mrf.mxu0
        %807 = vmatprep.mubr.f32.mxu0 0.0
        %808 = vmatmul.mubr.f32.gmra.mxu0 %v730
        %v809 = vpop.f32.mrf.mxu0
        %v810 = vadd.f32 0.0, %v809
        %v811 = vpop.f32.mrf.mxu0
        %812 = vdwg.mxu0
        %v814 = vsel %vm357, %v721, 0
        %v817 = vsel %vm357, %v722, 0
        %v820 = vsel %vm357, %v534, 0
        %v823 = vsel %vm357, %v535, 0
        %825 = vmatprep.subr.mxu0 0.0
        %826 = vmatpush1.xpose.msra.mxu0 0.0
        %827 = vmatprep.subr.mxu0 0.0
        %828 = vmatpush1.xpose.msra.mxu0 0.0
        %829 = vmatprep.subr.mxu0 0.0
        %830 = vmatpush1.xpose.msra.mxu0 0.0
        %831 = vmatprep.subr.mxu0 0.0
        %832 = vmatpush1.xpose.msra.mxu0 0.0
        %833 = vmatprep.subr.mxu0 0.0
        %834 = vmatpush1.xpose.msra.mxu0 0.0
        %835 = vmatprep.subr.mxu0 0.0
        %836 = vmatpush1.xpose.msra.mxu0 0.0
        %837 = vmatprep.subr.mxu0 0.0
        %838 = vmatpush1.xpose.msra.mxu0 0.0
        %839 = vmatprep.subr.mxu0 0.0
        %840 = vmatpush1.xpose.msra.mxu0 0.0
        %841 = vmatprep.subr.mxu0 0.0
        %842 = vmatpush1.xpose.msra.mxu0 0.0
        %843 = vmatprep.subr.mxu0 0.0
        %844 = vmatpush1.xpose.msra.mxu0 0.0
        %845 = vmatprep.subr.mxu0 0.0
        %846 = vmatpush1.xpose.msra.mxu0 0.0
        %847 = vmatprep.subr.mxu0 0.0
        %848 = vmatpush1.xpose.msra.mxu0 0.0
        %849 = vmatprep.subr.mxu0 0.0
        %850 = vmatpush1.xpose.msra.mxu0 0.0
        %851 = vmatprep.subr.mxu0 0.0
        %852 = vmatpush1.xpose.msra.mxu0 0.0
        %853 = vmatprep.subr.mxu0 0.0
        %854 = vmatpush1.xpose.msra.mxu0 %v823
        %855 = vmatprep.subr.mxu0 0.0
        %856 = vmatpush1.xpose.msra.mxu0 %v820
        %857 = vmatprep.subr.mxu0 0.0
        %858 = vmatpush2.xpose.msra.mxu0 0.0
        %859 = vmatprep.subr.mxu0 0.0
        %860 = vmatpush2.xpose.msra.mxu0 0.0
        %861 = vmatprep.subr.mxu0 0.0
        %862 = vmatpush2.xpose.msra.mxu0 0.0
        %863 = vmatprep.subr.mxu0 0.0
        %864 = vmatpush2.xpose.msra.mxu0 0.0
        %865 = vmatprep.subr.mxu0 0.0
        %866 = vmatpush2.xpose.msra.mxu0 0.0
        %867 = vmatprep.subr.mxu0 0.0
        %868 = vmatpush2.xpose.msra.mxu0 0.0
        %869 = vmatprep.subr.mxu0 0.0
        %870 = vmatpush2.xpose.msra.mxu0 0.0
        %871 = vmatprep.subr.mxu0 0.0
        %872 = vmatpush2.xpose.msra.mxu0 0.0
        %873 = vmatprep.subr.mxu0 0.0
        %874 = vmatpush2.xpose.msra.mxu0 0.0
        %875 = vmatprep.subr.mxu0 0.0
        %876 = vmatpush2.xpose.msra.mxu0 0.0
        %877 = vmatprep.subr.mxu0 0.0
        %878 = vmatpush2.xpose.msra.mxu0 0.0
        %879 = vmatprep.subr.mxu0 0.0
        %880 = vmatpush2.xpose.msra.mxu0 0.0
        %881 = vmatprep.subr.mxu0 0.0
        %882 = vmatpush2.xpose.msra.mxu0 0.0
        %883 = vmatprep.subr.mxu0 0.0
        %884 = vmatpush2.xpose.msra.mxu0 0.0
        %885 = vmatprep.subr.mxu0 0.0
        %886 = vmatpush2.xpose.msra.mxu0 0.0
        %887 = vmatprep.subr.mxu0 0.0
        %888 = vmatpush2.xpose.msra.mxu0 0.0
        %889 = vmatprep.mubr.f32.mxu0 0.0
        %890 = vmatmul.mubr.f32.gmra.mxu0 %v814
        %v891 = vpop.f32.mrf.mxu0
        %v892 = vadd.f32 %v805, %v891
        %v893 = vpop.f32.mrf.mxu0
        %894 = vmatprep.mubr.f32.mxu0 0.0
        %895 = vmatmul.mubr.f32.gmra.mxu0 %v817
        %v896 = vpop.f32.mrf.mxu0
        %v897 = vadd.f32 %v810, %v896
        %v898 = vpop.f32.mrf.mxu0
        %899 = vdwg.mxu0
        %v900 = vld [vmem:[%s4] sm:$0xff]
        %v901 = vld [vmem:[%s4 + $0x8] sm:$0xff]
        %903 = vset.pattern.permute.xlu0 0
        %904 = vperm.xlu0 %903, %v900
        %v905 = vpop.permute.xlu0 %904
        %908 = vset.pattern.permute.xlu0 0
        %909 = vperm.xlu0 %908, %v901
        %v910 = vpop.permute.xlu0 %909
        %v912 = vadd.f32 %v892, %v905
        %v913 = vadd.f32 %v897, %v910
        %v914 = vtanh.pop %v912
        %v915 = vtanh.pop %v913
        %s916 = scalar_lea.vmem %s3, 32
        %v917 = vld [vmem:[%s916] sm:$0xff]
        %v918 = vld [vmem:[%s916 + $0x8] sm:$0xff]
        %s919 = scalar_lea.vmem %s3, 48
        %v920 = vld [vmem:[%s919] sm:$0xff]
        %v921 = vld [vmem:[%s919 + $0x8] sm:$0xff]
        %v923 = vsel %vm357, %v920, 0
        %v926 = vsel %vm357, %v921, 0
        %928 = vmatprep.subr.mxu0 0.0
        %929 = vmatpush1.xpose.msra.mxu0 0.0
        %930 = vmatprep.subr.mxu0 0.0
        %931 = vmatpush1.xpose.msra.mxu0 0.0
        %932 = vmatprep.subr.mxu0 0.0
        %933 = vmatpush1.xpose.msra.mxu0 0.0
        %934 = vmatprep.subr.mxu0 0.0
        %935 = vmatpush1.xpose.msra.mxu0 0.0
        %936 = vmatprep.subr.mxu0 0.0
        %937 = vmatpush1.xpose.msra.mxu0 0.0
        %938 = vmatprep.subr.mxu0 0.0
        %939 = vmatpush1.xpose.msra.mxu0 0.0
        %940 = vmatprep.subr.mxu0 0.0
        %941 = vmatpush1.xpose.msra.mxu0 0.0
        %942 = vmatprep.subr.mxu0 0.0
        %943 = vmatpush1.xpose.msra.mxu0 0.0
        %944 = vmatprep.subr.mxu0 0.0
        %945 = vmatpush1.xpose.msra.mxu0 0.0
        %946 = vmatprep.subr.mxu0 0.0
        %947 = vmatpush1.xpose.msra.mxu0 0.0
        %948 = vmatprep.subr.mxu0 0.0
        %949 = vmatpush1.xpose.msra.mxu0 0.0
        %950 = vmatprep.subr.mxu0 0.0
        %951 = vmatpush1.xpose.msra.mxu0 0.0
        %952 = vmatprep.subr.mxu0 0.0
        %953 = vmatpush1.xpose.msra.mxu0 0.0
        %954 = vmatprep.subr.mxu0 0.0
        %955 = vmatpush1.xpose.msra.mxu0 0.0
        %956 = vmatprep.subr.mxu0 0.0
        %957 = vmatpush1.xpose.msra.mxu0 %v736
        %958 = vmatprep.subr.mxu0 0.0
        %959 = vmatpush1.xpose.msra.mxu0 %v733
        %960 = vmatprep.subr.mxu0 0.0
        %961 = vmatpush2.xpose.msra.mxu0 0.0
        %962 = vmatprep.subr.mxu0 0.0
        %963 = vmatpush2.xpose.msra.mxu0 0.0
        %964 = vmatprep.subr.mxu0 0.0
        %965 = vmatpush2.xpose.msra.mxu0 0.0
        %966 = vmatprep.subr.mxu0 0.0
        %967 = vmatpush2.xpose.msra.mxu0 0.0
        %968 = vmatprep.subr.mxu0 0.0
        %969 = vmatpush2.xpose.msra.mxu0 0.0
        %970 = vmatprep.subr.mxu0 0.0
        %971 = vmatpush2.xpose.msra.mxu0 0.0
        %972 = vmatprep.subr.mxu0 0.0
        %973 = vmatpush2.xpose.msra.mxu0 0.0
        %974 = vmatprep.subr.mxu0 0.0
        %975 = vmatpush2.xpose.msra.mxu0 0.0
        %976 = vmatprep.subr.mxu0 0.0
        %977 = vmatpush2.xpose.msra.mxu0 0.0
        %978 = vmatprep.subr.mxu0 0.0
        %979 = vmatpush2.xpose.msra.mxu0 0.0
        %980 = vmatprep.subr.mxu0 0.0
        %981 = vmatpush2.xpose.msra.mxu0 0.0
        %982 = vmatprep.subr.mxu0 0.0
        %983 = vmatpush2.xpose.msra.mxu0 0.0
        %984 = vmatprep.subr.mxu0 0.0
        %985 = vmatpush2.xpose.msra.mxu0 0.0
        %986 = vmatprep.subr.mxu0 0.0
        %987 = vmatpush2.xpose.msra.mxu0 0.0
        %988 = vmatprep.subr.mxu0 0.0
        %989 = vmatpush2.xpose.msra.mxu0 0.0
        %990 = vmatprep.subr.mxu0 0.0
        %991 = vmatpush2.xpose.msra.mxu0 0.0
        %992 = vmatprep.mubr.f32.mxu0 0.0
        %993 = vmatmul.mubr.f32.gmra.mxu0 %v923
        %v994 = vpop.f32.mrf.mxu0
        %v995 = vadd.f32 0.0, %v994
        %v996 = vpop.f32.mrf.mxu0
        %997 = vmatprep.mubr.f32.mxu0 0.0
        %998 = vmatmul.mubr.f32.gmra.mxu0 %v926
        %v999 = vpop.f32.mrf.mxu0
        %v1000 = vadd.f32 0.0, %v999
        %v1001 = vpop.f32.mrf.mxu0
        %1002 = vdwg.mxu0
        %v1004 = vsel %vm357, %v917, 0
        %v1007 = vsel %vm357, %v918, 0
        %1009 = vmatprep.subr.mxu0 0.0
        %1010 = vmatpush1.xpose.msra.mxu0 0.0
        %1011 = vmatprep.subr.mxu0 0.0
        %1012 = vmatpush1.xpose.msra.mxu0 0.0
        %1013 = vmatprep.subr.mxu0 0.0
        %1014 = vmatpush1.xpose.msra.mxu0 0.0
        %1015 = vmatprep.subr.mxu0 0.0
        %1016 = vmatpush1.xpose.msra.mxu0 0.0
        %1017 = vmatprep.subr.mxu0 0.0
        %1018 = vmatpush1.xpose.msra.mxu0 0.0
        %1019 = vmatprep.subr.mxu0 0.0
        %1020 = vmatpush1.xpose.msra.mxu0 0.0
        %1021 = vmatprep.subr.mxu0 0.0
        %1022 = vmatpush1.xpose.msra.mxu0 0.0
        %1023 = vmatprep.subr.mxu0 0.0
        %1024 = vmatpush1.xpose.msra.mxu0 0.0
        %1025 = vmatprep.subr.mxu0 0.0
        %1026 = vmatpush1.xpose.msra.mxu0 0.0
        %1027 = vmatprep.subr.mxu0 0.0
        %1028 = vmatpush1.xpose.msra.mxu0 0.0
        %1029 = vmatprep.subr.mxu0 0.0
        %1030 = vmatpush1.xpose.msra.mxu0 0.0
        %1031 = vmatprep.subr.mxu0 0.0
        %1032 = vmatpush1.xpose.msra.mxu0 0.0
        %1033 = vmatprep.subr.mxu0 0.0
        %1034 = vmatpush1.xpose.msra.mxu0 0.0
        %1035 = vmatprep.subr.mxu0 0.0
        %1036 = vmatpush1.xpose.msra.mxu0 0.0
        %1037 = vmatprep.subr.mxu0 0.0
        %1038 = vmatpush1.xpose.msra.mxu0 %v823
        %1039 = vmatprep.subr.mxu0 0.0
        %1040 = vmatpush1.xpose.msra.mxu0 %v820
        %1041 = vmatprep.subr.mxu0 0.0
        %1042 = vmatpush2.xpose.msra.mxu0 0.0
        %1043 = vmatprep.subr.mxu0 0.0
        %1044 = vmatpush2.xpose.msra.mxu0 0.0
        %1045 = vmatprep.subr.mxu0 0.0
        %1046 = vmatpush2.xpose.msra.mxu0 0.0
        %1047 = vmatprep.subr.mxu0 0.0
        %1048 = vmatpush2.xpose.msra.mxu0 0.0
        %1049 = vmatprep.subr.mxu0 0.0
        %1050 = vmatpush2.xpose.msra.mxu0 0.0
        %1051 = vmatprep.subr.mxu0 0.0
        %1052 = vmatpush2.xpose.msra.mxu0 0.0
        %1053 = vmatprep.subr.mxu0 0.0
        %1054 = vmatpush2.xpose.msra.mxu0 0.0
        %1055 = vmatprep.subr.mxu0 0.0
        %1056 = vmatpush2.xpose.msra.mxu0 0.0
        %1057 = vmatprep.subr.mxu0 0.0
        %1058 = vmatpush2.xpose.msra.mxu0 0.0
        %1059 = vmatprep.subr.mxu0 0.0
        %1060 = vmatpush2.xpose.msra.mxu0 0.0
        %1061 = vmatprep.subr.mxu0 0.0
        %1062 = vmatpush2.xpose.msra.mxu0 0.0
        %1063 = vmatprep.subr.mxu0 0.0
        %1064 = vmatpush2.xpose.msra.mxu0 0.0
        %1065 = vmatprep.subr.mxu0 0.0
        %1066 = vmatpush2.xpose.msra.mxu0 0.0
        %1067 = vmatprep.subr.mxu0 0.0
        %1068 = vmatpush2.xpose.msra.mxu0 0.0
        %1069 = vmatprep.subr.mxu0 0.0
        %1070 = vmatpush2.xpose.msra.mxu0 0.0
        %1071 = vmatprep.subr.mxu0 0.0
        %1072 = vmatpush2.xpose.msra.mxu0 0.0
        %1073 = vmatprep.mubr.f32.mxu0 0.0
        %1074 = vmatmul.mubr.f32.gmra.mxu0 %v1004
        %v1075 = vpop.f32.mrf.mxu0
        %v1076 = vadd.f32 %v995, %v1075
        %v1077 = vpop.f32.mrf.mxu0
        %1078 = vmatprep.mubr.f32.mxu0 0.0
        %1079 = vmatmul.mubr.f32.gmra.mxu0 %v1007
        %v1080 = vpop.f32.mrf.mxu0
        %v1081 = vadd.f32 %v1000, %v1080
        %v1082 = vpop.f32.mrf.mxu0
        %1083 = vdwg.mxu0
        %s1084 = scalar_lea.vmem %s4, 16
        %v1085 = vld [vmem:[%s1084] sm:$0xff]
        %v1086 = vld [vmem:[%s1084 + $0x8] sm:$0xff]
        %1088 = vset.pattern.permute.xlu0 0
        %1089 = vperm.xlu0 %1088, %v1085
        %v1090 = vpop.permute.xlu0 %1089
        %1093 = vset.pattern.permute.xlu0 0
        %1094 = vperm.xlu0 %1093, %v1086
        %v1095 = vpop.permute.xlu0 %1094
        %v1097 = vadd.f32 %v1076, %v1090
        %v1098 = vadd.f32 %v1081, %v1095
        %v1099 = vtanh.pop %v1097
        %v1100 = vtanh.pop %v1098
        %v1101 = vld [vmem:[%s5] sm:$0xff]
        %v1102 = vld [vmem:[%s5 + $0x8] sm:$0xff]
        %s1103 = scalar_lea.vmem %s5, 16
        %v1104 = vld [vmem:[%s1103] sm:$0xff]
        %v1105 = vld [vmem:[%s1103 + $0x8] sm:$0xff]
        %v1107 = vsel %vm357, %v1104, 0
        %v1110 = vsel %vm357, %v1105, 0
        %v1113 = vsel %vm357, %v1099, 0
        %v1116 = vsel %vm357, %v1100, 0
        %1118 = vmatprep.subr.mxu0 0.0
        %1119 = vmatpush1.xpose.msra.mxu0 0.0
        %1120 = vmatprep.subr.mxu0 0.0
        %1121 = vmatpush1.xpose.msra.mxu0 0.0
        %1122 = vmatprep.subr.mxu0 0.0
        %1123 = vmatpush1.xpose.msra.mxu0 0.0
        %1124 = vmatprep.subr.mxu0 0.0
        %1125 = vmatpush1.xpose.msra.mxu0 0.0
        %1126 = vmatprep.subr.mxu0 0.0
        %1127 = vmatpush1.xpose.msra.mxu0 0.0
        %1128 = vmatprep.subr.mxu0 0.0
        %1129 = vmatpush1.xpose.msra.mxu0 0.0
        %1130 = vmatprep.subr.mxu0 0.0
        %1131 = vmatpush1.xpose.msra.mxu0 0.0
        %1132 = vmatprep.subr.mxu0 0.0
        %1133 = vmatpush1.xpose.msra.mxu0 0.0
        %1134 = vmatprep.subr.mxu0 0.0
        %1135 = vmatpush1.xpose.msra.mxu0 0.0
        %1136 = vmatprep.subr.mxu0 0.0
        %1137 = vmatpush1.xpose.msra.mxu0 0.0
        %1138 = vmatprep.subr.mxu0 0.0
        %1139 = vmatpush1.xpose.msra.mxu0 0.0
        %1140 = vmatprep.subr.mxu0 0.0
        %1141 = vmatpush1.xpose.msra.mxu0 0.0
        %1142 = vmatprep.subr.mxu0 0.0
        %1143 = vmatpush1.xpose.msra.mxu0 0.0
        %1144 = vmatprep.subr.mxu0 0.0
        %1145 = vmatpush1.xpose.msra.mxu0 0.0
        %1146 = vmatprep.subr.mxu0 0.0
        %1147 = vmatpush1.xpose.msra.mxu0 %v1116
        %1148 = vmatprep.subr.mxu0 0.0
        %1149 = vmatpush1.xpose.msra.mxu0 %v1113
        %1150 = vmatprep.subr.mxu0 0.0
        %1151 = vmatpush2.xpose.msra.mxu0 0.0
        %1152 = vmatprep.subr.mxu0 0.0
        %1153 = vmatpush2.xpose.msra.mxu0 0.0
        %1154 = vmatprep.subr.mxu0 0.0
        %1155 = vmatpush2.xpose.msra.mxu0 0.0
        %1156 = vmatprep.subr.mxu0 0.0
        %1157 = vmatpush2.xpose.msra.mxu0 0.0
        %1158 = vmatprep.subr.mxu0 0.0
        %1159 = vmatpush2.xpose.msra.mxu0 0.0
        %1160 = vmatprep.subr.mxu0 0.0
        %1161 = vmatpush2.xpose.msra.mxu0 0.0
        %1162 = vmatprep.subr.mxu0 0.0
        %1163 = vmatpush2.xpose.msra.mxu0 0.0
        %1164 = vmatprep.subr.mxu0 0.0
        %1165 = vmatpush2.xpose.msra.mxu0 0.0
        %1166 = vmatprep.subr.mxu0 0.0
        %1167 = vmatpush2.xpose.msra.mxu0 0.0
        %1168 = vmatprep.subr.mxu0 0.0
        %1169 = vmatpush2.xpose.msra.mxu0 0.0
        %1170 = vmatprep.subr.mxu0 0.0
        %1171 = vmatpush2.xpose.msra.mxu0 0.0
        %1172 = vmatprep.subr.mxu0 0.0
        %1173 = vmatpush2.xpose.msra.mxu0 0.0
        %1174 = vmatprep.subr.mxu0 0.0
        %1175 = vmatpush2.xpose.msra.mxu0 0.0
        %1176 = vmatprep.subr.mxu0 0.0
        %1177 = vmatpush2.xpose.msra.mxu0 0.0
        %1178 = vmatprep.subr.mxu0 0.0
        %1179 = vmatpush2.xpose.msra.mxu0 0.0
        %1180 = vmatprep.subr.mxu0 0.0
        %1181 = vmatpush2.xpose.msra.mxu0 0.0
        %1182 = vmatprep.mubr.f32.mxu0 0.0
        %1183 = vmatmul.mubr.f32.gmra.mxu0 %v1107
        %v1184 = vpop.f32.mrf.mxu0
        %v1185 = vadd.f32 0.0, %v1184
        %v1186 = vpop.f32.mrf.mxu0
        %1187 = vmatprep.mubr.f32.mxu0 0.0
        %1188 = vmatmul.mubr.f32.gmra.mxu0 %v1110
        %v1189 = vpop.f32.mrf.mxu0
        %v1190 = vadd.f32 0.0, %v1189
        %v1191 = vpop.f32.mrf.mxu0
        %1192 = vdwg.mxu0
        %v1194 = vsel %vm357, %v1101, 0
        %v1197 = vsel %vm357, %v1102, 0
        %v1200 = vsel %vm357, %v914, 0
        %v1203 = vsel %vm357, %v915, 0
        %1205 = vmatprep.subr.mxu0 0.0
        %1206 = vmatpush1.xpose.msra.mxu0 0.0
        %1207 = vmatprep.subr.mxu0 0.0
        %1208 = vmatpush1.xpose.msra.mxu0 0.0
        %1209 = vmatprep.subr.mxu0 0.0
        %1210 = vmatpush1.xpose.msra.mxu0 0.0
        %1211 = vmatprep.subr.mxu0 0.0
        %1212 = vmatpush1.xpose.msra.mxu0 0.0
        %1213 = vmatprep.subr.mxu0 0.0
        %1214 = vmatpush1.xpose.msra.mxu0 0.0
        %1215 = vmatprep.subr.mxu0 0.0
        %1216 = vmatpush1.xpose.msra.mxu0 0.0
        %1217 = vmatprep.subr.mxu0 0.0
        %1218 = vmatpush1.xpose.msra.mxu0 0.0
        %1219 = vmatprep.subr.mxu0 0.0
        %1220 = vmatpush1.xpose.msra.mxu0 0.0
        %1221 = vmatprep.subr.mxu0 0.0
        %1222 = vmatpush1.xpose.msra.mxu0 0.0
        %1223 = vmatprep.subr.mxu0 0.0
        %1224 = vmatpush1.xpose.msra.mxu0 0.0
        %1225 = vmatprep.subr.mxu0 0.0
        %1226 = vmatpush1.xpose.msra.mxu0 0.0
        %1227 = vmatprep.subr.mxu0 0.0
        %1228 = vmatpush1.xpose.msra.mxu0 0.0
        %1229 = vmatprep.subr.mxu0 0.0
        %1230 = vmatpush1.xpose.msra.mxu0 0.0
        %1231 = vmatprep.subr.mxu0 0.0
        %1232 = vmatpush1.xpose.msra.mxu0 0.0
        %1233 = vmatprep.subr.mxu0 0.0
        %1234 = vmatpush1.xpose.msra.mxu0 %v1203
        %1235 = vmatprep.subr.mxu0 0.0
        %1236 = vmatpush1.xpose.msra.mxu0 %v1200
        %1237 = vmatprep.subr.mxu0 0.0
        %1238 = vmatpush2.xpose.msra.mxu0 0.0
        %1239 = vmatprep.subr.mxu0 0.0
        %1240 = vmatpush2.xpose.msra.mxu0 0.0
        %1241 = vmatprep.subr.mxu0 0.0
        %1242 = vmatpush2.xpose.msra.mxu0 0.0
        %1243 = vmatprep.subr.mxu0 0.0
        %1244 = vmatpush2.xpose.msra.mxu0 0.0
        %1245 = vmatprep.subr.mxu0 0.0
        %1246 = vmatpush2.xpose.msra.mxu0 0.0
        %1247 = vmatprep.subr.mxu0 0.0
        %1248 = vmatpush2.xpose.msra.mxu0 0.0
        %1249 = vmatprep.subr.mxu0 0.0
        %1250 = vmatpush2.xpose.msra.mxu0 0.0
        %1251 = vmatprep.subr.mxu0 0.0
        %1252 = vmatpush2.xpose.msra.mxu0 0.0
        %1253 = vmatprep.subr.mxu0 0.0
        %1254 = vmatpush2.xpose.msra.mxu0 0.0
        %1255 = vmatprep.subr.mxu0 0.0
        %1256 = vmatpush2.xpose.msra.mxu0 0.0
        %1257 = vmatprep.subr.mxu0 0.0
        %1258 = vmatpush2.xpose.msra.mxu0 0.0
        %1259 = vmatprep.subr.mxu0 0.0
        %1260 = vmatpush2.xpose.msra.mxu0 0.0
        %1261 = vmatprep.subr.mxu0 0.0
        %1262 = vmatpush2.xpose.msra.mxu0 0.0
        %1263 = vmatprep.subr.mxu0 0.0
        %1264 = vmatpush2.xpose.msra.mxu0 0.0
        %1265 = vmatprep.subr.mxu0 0.0
        %1266 = vmatpush2.xpose.msra.mxu0 0.0
        %1267 = vmatprep.subr.mxu0 0.0
        %1268 = vmatpush2.xpose.msra.mxu0 0.0
        %1269 = vmatprep.mubr.f32.mxu0 0.0
        %1270 = vmatmul.mubr.f32.gmra.mxu0 %v1194
        %v1271 = vpop.f32.mrf.mxu0
        %v1272 = vadd.f32 %v1185, %v1271
        %v1273 = vpop.f32.mrf.mxu0
        %1274 = vmatprep.mubr.f32.mxu0 0.0
        %1275 = vmatmul.mubr.f32.gmra.mxu0 %v1197
        %v1276 = vpop.f32.mrf.mxu0
        %v1277 = vadd.f32 %v1190, %v1276
        %v1278 = vpop.f32.mrf.mxu0
        %1279 = vdwg.mxu0
        %v1280 = vld [vmem:[%s6] sm:$0xff]
        %v1281 = vld [vmem:[%s6 + $0x8] sm:$0xff]
        %1283 = vset.pattern.permute.xlu0 0
        %1284 = vperm.xlu0 %1283, %v1280
        %v1285 = vpop.permute.xlu0 %1284
        %1288 = vset.pattern.permute.xlu0 0
        %1289 = vperm.xlu0 %1288, %v1281
        %v1290 = vpop.permute.xlu0 %1289
        %v1292 = vadd.f32 %v1272, %v1285
        %v1293 = vadd.f32 %v1277, %v1290
        %v1294 = vmax.f32 %v1292, 0.0
        %v1295 = vmax.f32 %v1293, 0.0
        %s1296 = scalar_lea.vmem %s5, 32
        %v1297 = vld [vmem:[%s1296] sm:$0xff]
        %v1298 = vld [vmem:[%s1296 + $0x8] sm:$0xff]
        %s1299 = scalar_lea.vmem %s5, 48
        %v1300 = vld [vmem:[%s1299] sm:$0xff]
        %v1301 = vld [vmem:[%s1299 + $0x8] sm:$0xff]
        %v1303 = vsel %vm357, %v1300, 0
        %v1306 = vsel %vm357, %v1301, 0
        %1308 = vmatprep.subr.mxu0 0.0
        %1309 = vmatpush1.xpose.msra.mxu0 0.0
        %1310 = vmatprep.subr.mxu0 0.0
        %1311 = vmatpush1.xpose.msra.mxu0 0.0
        %1312 = vmatprep.subr.mxu0 0.0
        %1313 = vmatpush1.xpose.msra.mxu0 0.0
        %1314 = vmatprep.subr.mxu0 0.0
        %1315 = vmatpush1.xpose.msra.mxu0 0.0
        %1316 = vmatprep.subr.mxu0 0.0
        %1317 = vmatpush1.xpose.msra.mxu0 0.0
        %1318 = vmatprep.subr.mxu0 0.0
        %1319 = vmatpush1.xpose.msra.mxu0 0.0
        %1320 = vmatprep.subr.mxu0 0.0
        %1321 = vmatpush1.xpose.msra.mxu0 0.0
        %1322 = vmatprep.subr.mxu0 0.0
        %1323 = vmatpush1.xpose.msra.mxu0 0.0
        %1324 = vmatprep.subr.mxu0 0.0
        %1325 = vmatpush1.xpose.msra.mxu0 0.0
        %1326 = vmatprep.subr.mxu0 0.0
        %1327 = vmatpush1.xpose.msra.mxu0 0.0
        %1328 = vmatprep.subr.mxu0 0.0
        %1329 = vmatpush1.xpose.msra.mxu0 0.0
        %1330 = vmatprep.subr.mxu0 0.0
        %1331 = vmatpush1.xpose.msra.mxu0 0.0
        %1332 = vmatprep.subr.mxu0 0.0
        %1333 = vmatpush1.xpose.msra.mxu0 0.0
        %1334 = vmatprep.subr.mxu0 0.0
        %1335 = vmatpush1.xpose.msra.mxu0 0.0
        %1336 = vmatprep.subr.mxu0 0.0
        %1337 = vmatpush1.xpose.msra.mxu0 %v1116
        %1338 = vmatprep.subr.mxu0 0.0
        %1339 = vmatpush1.xpose.msra.mxu0 %v1113
        %1340 = vmatprep.subr.mxu0 0.0
        %1341 = vmatpush2.xpose.msra.mxu0 0.0
        %1342 = vmatprep.subr.mxu0 0.0
        %1343 = vmatpush2.xpose.msra.mxu0 0.0
        %1344 = vmatprep.subr.mxu0 0.0
        %1345 = vmatpush2.xpose.msra.mxu0 0.0
        %1346 = vmatprep.subr.mxu0 0.0
        %1347 = vmatpush2.xpose.msra.mxu0 0.0
        %1348 = vmatprep.subr.mxu0 0.0
        %1349 = vmatpush2.xpose.msra.mxu0 0.0
        %1350 = vmatprep.subr.mxu0 0.0
        %1351 = vmatpush2.xpose.msra.mxu0 0.0
        %1352 = vmatprep.subr.mxu0 0.0
        %1353 = vmatpush2.xpose.msra.mxu0 0.0
        %1354 = vmatprep.subr.mxu0 0.0
        %1355 = vmatpush2.xpose.msra.mxu0 0.0
        %1356 = vmatprep.subr.mxu0 0.0
        %1357 = vmatpush2.xpose.msra.mxu0 0.0
        %1358 = vmatprep.subr.mxu0 0.0
        %1359 = vmatpush2.xpose.msra.mxu0 0.0
        %1360 = vmatprep.subr.mxu0 0.0
        %1361 = vmatpush2.xpose.msra.mxu0 0.0
        %1362 = vmatprep.subr.mxu0 0.0
        %1363 = vmatpush2.xpose.msra.mxu0 0.0
        %1364 = vmatprep.subr.mxu0 0.0
        %1365 = vmatpush2.xpose.msra.mxu0 0.0
        %1366 = vmatprep.subr.mxu0 0.0
        %1367 = vmatpush2.xpose.msra.mxu0 0.0
        %1368 = vmatprep.subr.mxu0 0.0
        %1369 = vmatpush2.xpose.msra.mxu0 0.0
        %1370 = vmatprep.subr.mxu0 0.0
        %1371 = vmatpush2.xpose.msra.mxu0 0.0
        %1372 = vmatprep.mubr.f32.mxu0 0.0
        %1373 = vmatmul.mubr.f32.gmra.mxu0 %v1303
        %v1374 = vpop.f32.mrf.mxu0
        %v1375 = vadd.f32 0.0, %v1374
        %v1376 = vpop.f32.mrf.mxu0
        %1377 = vmatprep.mubr.f32.mxu0 0.0
        %1378 = vmatmul.mubr.f32.gmra.mxu0 %v1306
        %v1379 = vpop.f32.mrf.mxu0
        %v1380 = vadd.f32 0.0, %v1379
        %v1381 = vpop.f32.mrf.mxu0
        %1382 = vdwg.mxu0
        %v1384 = vsel %vm357, %v1297, 0
        %v1387 = vsel %vm357, %v1298, 0
        %1389 = vmatprep.subr.mxu0 0.0
        %1390 = vmatpush1.xpose.msra.mxu0 0.0
        %1391 = vmatprep.subr.mxu0 0.0
        %1392 = vmatpush1.xpose.msra.mxu0 0.0
        %1393 = vmatprep.subr.mxu0 0.0
        %1394 = vmatpush1.xpose.msra.mxu0 0.0
        %1395 = vmatprep.subr.mxu0 0.0
        %1396 = vmatpush1.xpose.msra.mxu0 0.0
        %1397 = vmatprep.subr.mxu0 0.0
        %1398 = vmatpush1.xpose.msra.mxu0 0.0
        %1399 = vmatprep.subr.mxu0 0.0
        %1400 = vmatpush1.xpose.msra.mxu0 0.0
        %1401 = vmatprep.subr.mxu0 0.0
        %1402 = vmatpush1.xpose.msra.mxu0 0.0
        %1403 = vmatprep.subr.mxu0 0.0
        %1404 = vmatpush1.xpose.msra.mxu0 0.0
        %1405 = vmatprep.subr.mxu0 0.0
        %1406 = vmatpush1.xpose.msra.mxu0 0.0
        %1407 = vmatprep.subr.mxu0 0.0
        %1408 = vmatpush1.xpose.msra.mxu0 0.0
        %1409 = vmatprep.subr.mxu0 0.0
        %1410 = vmatpush1.xpose.msra.mxu0 0.0
        %1411 = vmatprep.subr.mxu0 0.0
        %1412 = vmatpush1.xpose.msra.mxu0 0.0
        %1413 = vmatprep.subr.mxu0 0.0
        %1414 = vmatpush1.xpose.msra.mxu0 0.0
        %1415 = vmatprep.subr.mxu0 0.0
        %1416 = vmatpush1.xpose.msra.mxu0 0.0
        %1417 = vmatprep.subr.mxu0 0.0
        %1418 = vmatpush1.xpose.msra.mxu0 %v1203
        %1419 = vmatprep.subr.mxu0 0.0
        %1420 = vmatpush1.xpose.msra.mxu0 %v1200
        %1421 = vmatprep.subr.mxu0 0.0
        %1422 = vmatpush2.xpose.msra.mxu0 0.0
        %1423 = vmatprep.subr.mxu0 0.0
        %1424 = vmatpush2.xpose.msra.mxu0 0.0
        %1425 = vmatprep.subr.mxu0 0.0
        %1426 = vmatpush2.xpose.msra.mxu0 0.0
        %1427 = vmatprep.subr.mxu0 0.0
        %1428 = vmatpush2.xpose.msra.mxu0 0.0
        %1429 = vmatprep.subr.mxu0 0.0
        %1430 = vmatpush2.xpose.msra.mxu0 0.0
        %1431 = vmatprep.subr.mxu0 0.0
        %1432 = vmatpush2.xpose.msra.mxu0 0.0
        %1433 = vmatprep.subr.mxu0 0.0
        %1434 = vmatpush2.xpose.msra.mxu0 0.0
        %1435 = vmatprep.subr.mxu0 0.0
        %1436 = vmatpush2.xpose.msra.mxu0 0.0
        %1437 = vmatprep.subr.mxu0 0.0
        %1438 = vmatpush2.xpose.msra.mxu0 0.0
        %1439 = vmatprep.subr.mxu0 0.0
        %1440 = vmatpush2.xpose.msra.mxu0 0.0
        %1441 = vmatprep.subr.mxu0 0.0
        %1442 = vmatpush2.xpose.msra.mxu0 0.0
        %1443 = vmatprep.subr.mxu0 0.0
        %1444 = vmatpush2.xpose.msra.mxu0 0.0
        %1445 = vmatprep.subr.mxu0 0.0
        %1446 = vmatpush2.xpose.msra.mxu0 0.0
        %1447 = vmatprep.subr.mxu0 0.0
        %1448 = vmatpush2.xpose.msra.mxu0 0.0
        %1449 = vmatprep.subr.mxu0 0.0
        %1450 = vmatpush2.xpose.msra.mxu0 0.0
        %1451 = vmatprep.subr.mxu0 0.0
        %1452 = vmatpush2.xpose.msra.mxu0 0.0
        %1453 = vmatprep.mubr.f32.mxu0 0.0
        %1454 = vmatmul.mubr.f32.gmra.mxu0 %v1384
        %v1455 = vpop.f32.mrf.mxu0
        %v1456 = vadd.f32 %v1375, %v1455
        %v1457 = vpop.f32.mrf.mxu0
        %1458 = vmatprep.mubr.f32.mxu0 0.0
        %1459 = vmatmul.mubr.f32.gmra.mxu0 %v1387
        %v1460 = vpop.f32.mrf.mxu0
        %v1461 = vadd.f32 %v1380, %v1460
        %v1462 = vpop.f32.mrf.mxu0
        %1463 = vdwg.mxu0
        %s1464 = scalar_lea.vmem %s6, 16
        %v1465 = vld [vmem:[%s1464] sm:$0xff]
        %v1466 = vld [vmem:[%s1464 + $0x8] sm:$0xff]
        %1468 = vset.pattern.permute.xlu0 0
        %1469 = vperm.xlu0 %1468, %v1465
        %v1470 = vpop.permute.xlu0 %1469
        %1473 = vset.pattern.permute.xlu0 0
        %1474 = vperm.xlu0 %1473, %v1466
        %v1475 = vpop.permute.xlu0 %1474
        %v1477 = vadd.f32 %v1456, %v1470
        %v1478 = vadd.f32 %v1461, %v1475
        %v1479 = vmax.f32 %v1477, 0.0
        %v1480 = vmax.f32 %v1478, 0.0
        %v1481 = vld [vmem:[#allocation2] sm:$0xff]
        %v1482 = vld [vmem:[#allocation2 + $0x8] sm:$0xff]
        %s1483 = scalar_lea.vmem [#allocation2], 16
        %v1484 = vld [vmem:[%s1483] sm:$0xff]
        %v1485 = vld [vmem:[%s1483 + $0x8] sm:$0xff]
        %v1487 = vsel %vm357, %v1479, 0
        %v1490 = vsel %vm357, %v1480, 0
        %v1493 = vsel %vm357, %v1484, 0
        %v1496 = vsel %vm357, %v1485, 0
        %1498 = vmatprep.subr.mxu0 0.0
        %1499 = vmatpush1.xpose.msra.mxu0 0.0
        %1500 = vmatprep.subr.mxu0 0.0
        %1501 = vmatpush1.xpose.msra.mxu0 0.0
        %1502 = vmatprep.subr.mxu0 0.0
        %1503 = vmatpush1.xpose.msra.mxu0 0.0
        %1504 = vmatprep.subr.mxu0 0.0
        %1505 = vmatpush1.xpose.msra.mxu0 0.0
        %1506 = vmatprep.subr.mxu0 0.0
        %1507 = vmatpush1.xpose.msra.mxu0 0.0
        %1508 = vmatprep.subr.mxu0 0.0
        %1509 = vmatpush1.xpose.msra.mxu0 0.0
        %1510 = vmatprep.subr.mxu0 0.0
        %1511 = vmatpush1.xpose.msra.mxu0 0.0
        %1512 = vmatprep.subr.mxu0 0.0
        %1513 = vmatpush1.xpose.msra.mxu0 0.0
        %1514 = vmatprep.subr.mxu0 0.0
        %1515 = vmatpush1.xpose.msra.mxu0 0.0
        %1516 = vmatprep.subr.mxu0 0.0
        %1517 = vmatpush1.xpose.msra.mxu0 0.0
        %1518 = vmatprep.subr.mxu0 0.0
        %1519 = vmatpush1.xpose.msra.mxu0 0.0
        %1520 = vmatprep.subr.mxu0 0.0
        %1521 = vmatpush1.xpose.msra.mxu0 0.0
        %1522 = vmatprep.subr.mxu0 0.0
        %1523 = vmatpush1.xpose.msra.mxu0 0.0
        %1524 = vmatprep.subr.mxu0 0.0
        %1525 = vmatpush1.xpose.msra.mxu0 0.0
        %1526 = vmatprep.subr.mxu0 0.0
        %1527 = vmatpush1.xpose.msra.mxu0 %v1496
        %1528 = vmatprep.subr.mxu0 0.0
        %1529 = vmatpush1.xpose.msra.mxu0 %v1493
        %1530 = vmatprep.subr.mxu0 0.0
        %1531 = vmatpush2.xpose.msra.mxu0 0.0
        %1532 = vmatprep.subr.mxu0 0.0
        %1533 = vmatpush2.xpose.msra.mxu0 0.0
        %1534 = vmatprep.subr.mxu0 0.0
        %1535 = vmatpush2.xpose.msra.mxu0 0.0
        %1536 = vmatprep.subr.mxu0 0.0
        %1537 = vmatpush2.xpose.msra.mxu0 0.0
        %1538 = vmatprep.subr.mxu0 0.0
        %1539 = vmatpush2.xpose.msra.mxu0 0.0
        %1540 = vmatprep.subr.mxu0 0.0
        %1541 = vmatpush2.xpose.msra.mxu0 0.0
        %1542 = vmatprep.subr.mxu0 0.0
        %1543 = vmatpush2.xpose.msra.mxu0 0.0
        %1544 = vmatprep.subr.mxu0 0.0
        %1545 = vmatpush2.xpose.msra.mxu0 0.0
        %1546 = vmatprep.subr.mxu0 0.0
        %1547 = vmatpush2.xpose.msra.mxu0 0.0
        %1548 = vmatprep.subr.mxu0 0.0
        %1549 = vmatpush2.xpose.msra.mxu0 0.0
        %1550 = vmatprep.subr.mxu0 0.0
        %1551 = vmatpush2.xpose.msra.mxu0 0.0
        %1552 = vmatprep.subr.mxu0 0.0
        %1553 = vmatpush2.xpose.msra.mxu0 0.0
        %1554 = vmatprep.subr.mxu0 0.0
        %1555 = vmatpush2.xpose.msra.mxu0 0.0
        %1556 = vmatprep.subr.mxu0 0.0
        %1557 = vmatpush2.xpose.msra.mxu0 0.0
        %1558 = vmatprep.subr.mxu0 0.0
        %1559 = vmatpush2.xpose.msra.mxu0 0.0
        %1560 = vmatprep.subr.mxu0 0.0
        %1561 = vmatpush2.xpose.msra.mxu0 0.0
        %1562 = vmatprep.mubr.f32.mxu0 0.0
        %1563 = vmatmul.mubr.f32.gmra.mxu0 %v1487
        %v1564 = vpop.f32.mrf.mxu0
        %v1565 = vadd.f32 0.0, %v1564
        %v1566 = vpop.f32.mrf.mxu0
        %1567 = vmatprep.mubr.f32.mxu0 0.0
        %1568 = vmatmul.mubr.f32.gmra.mxu0 %v1490
        %v1569 = vpop.f32.mrf.mxu0
        %v1570 = vadd.f32 0.0, %v1569
        %v1571 = vpop.f32.mrf.mxu0
        %1572 = vdwg.mxu0
        %v1574 = vsel %vm357, %v1294, 0
        %v1577 = vsel %vm357, %v1295, 0
        %v1580 = vsel %vm357, %v1481, 0
        %v1583 = vsel %vm357, %v1482, 0
        %1585 = vmatprep.subr.mxu0 0.0
        %1586 = vmatpush1.xpose.msra.mxu0 0.0
        %1587 = vmatprep.subr.mxu0 0.0
        %1588 = vmatpush1.xpose.msra.mxu0 0.0
        %1589 = vmatprep.subr.mxu0 0.0
        %1590 = vmatpush1.xpose.msra.mxu0 0.0
        %1591 = vmatprep.subr.mxu0 0.0
        %1592 = vmatpush1.xpose.msra.mxu0 0.0
        %1593 = vmatprep.subr.mxu0 0.0
        %1594 = vmatpush1.xpose.msra.mxu0 0.0
        %1595 = vmatprep.subr.mxu0 0.0
        %1596 = vmatpush1.xpose.msra.mxu0 0.0
        %1597 = vmatprep.subr.mxu0 0.0
        %1598 = vmatpush1.xpose.msra.mxu0 0.0
        %1599 = vmatprep.subr.mxu0 0.0
        %1600 = vmatpush1.xpose.msra.mxu0 0.0
        %1601 = vmatprep.subr.mxu0 0.0
        %1602 = vmatpush1.xpose.msra.mxu0 0.0
        %1603 = vmatprep.subr.mxu0 0.0
        %1604 = vmatpush1.xpose.msra.mxu0 0.0
        %1605 = vmatprep.subr.mxu0 0.0
        %1606 = vmatpush1.xpose.msra.mxu0 0.0
        %1607 = vmatprep.subr.mxu0 0.0
        %1608 = vmatpush1.xpose.msra.mxu0 0.0
        %1609 = vmatprep.subr.mxu0 0.0
        %1610 = vmatpush1.xpose.msra.mxu0 0.0
        %1611 = vmatprep.subr.mxu0 0.0
        %1612 = vmatpush1.xpose.msra.mxu0 0.0
        %1613 = vmatprep.subr.mxu0 0.0
        %1614 = vmatpush1.xpose.msra.mxu0 %v1583
        %1615 = vmatprep.subr.mxu0 0.0
        %1616 = vmatpush1.xpose.msra.mxu0 %v1580
        %1617 = vmatprep.subr.mxu0 0.0
        %1618 = vmatpush2.xpose.msra.mxu0 0.0
        %1619 = vmatprep.subr.mxu0 0.0
        %1620 = vmatpush2.xpose.msra.mxu0 0.0
        %1621 = vmatprep.subr.mxu0 0.0
        %1622 = vmatpush2.xpose.msra.mxu0 0.0
        %1623 = vmatprep.subr.mxu0 0.0
        %1624 = vmatpush2.xpose.msra.mxu0 0.0
        %1625 = vmatprep.subr.mxu0 0.0
        %1626 = vmatpush2.xpose.msra.mxu0 0.0
        %1627 = vmatprep.subr.mxu0 0.0
        %1628 = vmatpush2.xpose.msra.mxu0 0.0
        %1629 = vmatprep.subr.mxu0 0.0
        %1630 = vmatpush2.xpose.msra.mxu0 0.0
        %1631 = vmatprep.subr.mxu0 0.0
        %1632 = vmatpush2.xpose.msra.mxu0 0.0
        %1633 = vmatprep.subr.mxu0 0.0
        %1634 = vmatpush2.xpose.msra.mxu0 0.0
        %1635 = vmatprep.subr.mxu0 0.0
        %1636 = vmatpush2.xpose.msra.mxu0 0.0
        %1637 = vmatprep.subr.mxu0 0.0
        %1638 = vmatpush2.xpose.msra.mxu0 0.0
        %1639 = vmatprep.subr.mxu0 0.0
        %1640 = vmatpush2.xpose.msra.mxu0 0.0
        %1641 = vmatprep.subr.mxu0 0.0
        %1642 = vmatpush2.xpose.msra.mxu0 0.0
        %1643 = vmatprep.subr.mxu0 0.0
        %1644 = vmatpush2.xpose.msra.mxu0 0.0
        %1645 = vmatprep.subr.mxu0 0.0
        %1646 = vmatpush2.xpose.msra.mxu0 0.0
        %1647 = vmatprep.subr.mxu0 0.0
        %1648 = vmatpush2.xpose.msra.mxu0 0.0
        %1649 = vmatprep.mubr.f32.mxu0 0.0
        %1650 = vmatmul.mubr.f32.gmra.mxu0 %v1574
        %v1651 = vpop.f32.mrf.mxu0
        %v1652 = vadd.f32 %v1565, %v1651
        %v1653 = vpop.f32.mrf.mxu0
        %1654 = vmatprep.mubr.f32.mxu0 0.0
        %1655 = vmatmul.mubr.f32.gmra.mxu0 %v1577
        %v1656 = vpop.f32.mrf.mxu0
        %v1657 = vadd.f32 %v1570, %v1656
        %v1658 = vpop.f32.mrf.mxu0
        %1659 = vdwg.mxu0
        %v1660 = vld [vmem:[%s8] sm:$0x1]
        %v1662 = vlaneseq
        %v1663 = vshrl.u32 %v1662, 7
        %v1664 = vsub.s32 0, %v1663
        %v1665 = vrot.slane %v1660, %v1664
        %v1667 = vadd.f32 %v1652, %v1665
        %v1668 = vadd.f32 %v1657, %v1665
        %v1669 = vtanh.pop %v1667
        %v1670 = vtanh.pop %v1668
        %1671 = vst.msk [vmem:[%s347] sm:$0xff] %vm357, %v1669
        %1672 = vst.msk [vmem:[%s347 + $0x8] sm:$0xff] %vm357, %v1670
        %s1673 = scalar_lea.vmem [#allocation2], 32
        %v1674 = vld [vmem:[%s1673] sm:$0xff]
        %v1675 = vld [vmem:[%s1673 + $0x8] sm:$0xff]
        %s1676 = scalar_lea.vmem [#allocation2], 48
        %v1677 = vld [vmem:[%s1676] sm:$0xff]
        %v1678 = vld [vmem:[%s1676 + $0x8] sm:$0xff]
        %v1680 = vsel %vm357, %v1677, 0
        %v1683 = vsel %vm357, %v1678, 0
        %1685 = vmatprep.subr.mxu0 0.0
        %1686 = vmatpush1.xpose.msra.mxu0 0.0
        %1687 = vmatprep.subr.mxu0 0.0
        %1688 = vmatpush1.xpose.msra.mxu0 0.0
        %1689 = vmatprep.subr.mxu0 0.0
        %1690 = vmatpush1.xpose.msra.mxu0 0.0
        %1691 = vmatprep.subr.mxu0 0.0
        %1692 = vmatpush1.xpose.msra.mxu0 0.0
        %1693 = vmatprep.subr.mxu0 0.0
        %1694 = vmatpush1.xpose.msra.mxu0 0.0
        %1695 = vmatprep.subr.mxu0 0.0
        %1696 = vmatpush1.xpose.msra.mxu0 0.0
        %1697 = vmatprep.subr.mxu0 0.0
        %1698 = vmatpush1.xpose.msra.mxu0 0.0
        %1699 = vmatprep.subr.mxu0 0.0
        %1700 = vmatpush1.xpose.msra.mxu0 0.0
        %1701 = vmatprep.subr.mxu0 0.0
        %1702 = vmatpush1.xpose.msra.mxu0 0.0
        %1703 = vmatprep.subr.mxu0 0.0
        %1704 = vmatpush1.xpose.msra.mxu0 0.0
        %1705 = vmatprep.subr.mxu0 0.0
        %1706 = vmatpush1.xpose.msra.mxu0 0.0
        %1707 = vmatprep.subr.mxu0 0.0
        %1708 = vmatpush1.xpose.msra.mxu0 0.0
        %1709 = vmatprep.subr.mxu0 0.0
        %1710 = vmatpush1.xpose.msra.mxu0 0.0
        %1711 = vmatprep.subr.mxu0 0.0
        %1712 = vmatpush1.xpose.msra.mxu0 0.0
        %1713 = vmatprep.subr.mxu0 0.0
        %1714 = vmatpush1.xpose.msra.mxu0 %v1683
        %1715 = vmatprep.subr.mxu0 0.0
        %1716 = vmatpush1.xpose.msra.mxu0 %v1680
        %1717 = vmatprep.subr.mxu0 0.0
        %1718 = vmatpush2.xpose.msra.mxu0 0.0
        %1719 = vmatprep.subr.mxu0 0.0
        %1720 = vmatpush2.xpose.msra.mxu0 0.0
        %1721 = vmatprep.subr.mxu0 0.0
        %1722 = vmatpush2.xpose.msra.mxu0 0.0
        %1723 = vmatprep.subr.mxu0 0.0
        %1724 = vmatpush2.xpose.msra.mxu0 0.0
        %1725 = vmatprep.subr.mxu0 0.0
        %1726 = vmatpush2.xpose.msra.mxu0 0.0
        %1727 = vmatprep.subr.mxu0 0.0
        %1728 = vmatpush2.xpose.msra.mxu0 0.0
        %1729 = vmatprep.subr.mxu0 0.0
        %1730 = vmatpush2.xpose.msra.mxu0 0.0
        %1731 = vmatprep.subr.mxu0 0.0
        %1732 = vmatpush2.xpose.msra.mxu0 0.0
        %1733 = vmatprep.subr.mxu0 0.0
        %1734 = vmatpush2.xpose.msra.mxu0 0.0
        %1735 = vmatprep.subr.mxu0 0.0
        %1736 = vmatpush2.xpose.msra.mxu0 0.0
        %1737 = vmatprep.subr.mxu0 0.0
        %1738 = vmatpush2.xpose.msra.mxu0 0.0
        %1739 = vmatprep.subr.mxu0 0.0
        %1740 = vmatpush2.xpose.msra.mxu0 0.0
        %1741 = vmatprep.subr.mxu0 0.0
        %1742 = vmatpush2.xpose.msra.mxu0 0.0
        %1743 = vmatprep.subr.mxu0 0.0
        %1744 = vmatpush2.xpose.msra.mxu0 0.0
        %1745 = vmatprep.subr.mxu0 0.0
        %1746 = vmatpush2.xpose.msra.mxu0 0.0
        %1747 = vmatprep.subr.mxu0 0.0
        %1748 = vmatpush2.xpose.msra.mxu0 0.0
        %1749 = vmatprep.mubr.f32.mxu0 0.0
        %1750 = vmatmul.mubr.f32.gmra.mxu0 %v1487
        %v1751 = vpop.f32.mrf.mxu0
        %v1752 = vadd.f32 0.0, %v1751
        %v1753 = vpop.f32.mrf.mxu0
        %1754 = vmatprep.mubr.f32.mxu0 0.0
        %1755 = vmatmul.mubr.f32.gmra.mxu0 %v1490
        %v1756 = vpop.f32.mrf.mxu0
        %v1757 = vadd.f32 0.0, %v1756
        %v1758 = vpop.f32.mrf.mxu0
        %1759 = vdwg.mxu0
        %v1761 = vsel %vm357, %v1674, 0
        %v1764 = vsel %vm357, %v1675, 0
        %1766 = vmatprep.subr.mxu0 0.0
        %1767 = vmatpush1.xpose.msra.mxu0 0.0
        %1768 = vmatprep.subr.mxu0 0.0
        %1769 = vmatpush1.xpose.msra.mxu0 0.0
        %1770 = vmatprep.subr.mxu0 0.0
        %1771 = vmatpush1.xpose.msra.mxu0 0.0
        %1772 = vmatprep.subr.mxu0 0.0
        %1773 = vmatpush1.xpose.msra.mxu0 0.0
        %1774 = vmatprep.subr.mxu0 0.0
        %1775 = vmatpush1.xpose.msra.mxu0 0.0
        %1776 = vmatprep.subr.mxu0 0.0
        %1777 = vmatpush1.xpose.msra.mxu0 0.0
        %1778 = vmatprep.subr.mxu0 0.0
        %1779 = vmatpush1.xpose.msra.mxu0 0.0
        %1780 = vmatprep.subr.mxu0 0.0
        %1781 = vmatpush1.xpose.msra.mxu0 0.0
        %1782 = vmatprep.subr.mxu0 0.0
        %1783 = vmatpush1.xpose.msra.mxu0 0.0
        %1784 = vmatprep.subr.mxu0 0.0
        %1785 = vmatpush1.xpose.msra.mxu0 0.0
        %1786 = vmatprep.subr.mxu0 0.0
        %1787 = vmatpush1.xpose.msra.mxu0 0.0
        %1788 = vmatprep.subr.mxu0 0.0
        %1789 = vmatpush1.xpose.msra.mxu0 0.0
        %1790 = vmatprep.subr.mxu0 0.0
        %1791 = vmatpush1.xpose.msra.mxu0 0.0
        %1792 = vmatprep.subr.mxu0 0.0
        %1793 = vmatpush1.xpose.msra.mxu0 0.0
        %1794 = vmatprep.subr.mxu0 0.0
        %1795 = vmatpush1.xpose.msra.mxu0 %v1764
        %1796 = vmatprep.subr.mxu0 0.0
        %1797 = vmatpush1.xpose.msra.mxu0 %v1761
        %1798 = vmatprep.subr.mxu0 0.0
        %1799 = vmatpush2.xpose.msra.mxu0 0.0
        %1800 = vmatprep.subr.mxu0 0.0
        %1801 = vmatpush2.xpose.msra.mxu0 0.0
        %1802 = vmatprep.subr.mxu0 0.0
        %1803 = vmatpush2.xpose.msra.mxu0 0.0
        %1804 = vmatprep.subr.mxu0 0.0
        %1805 = vmatpush2.xpose.msra.mxu0 0.0
        %1806 = vmatprep.subr.mxu0 0.0
        %1807 = vmatpush2.xpose.msra.mxu0 0.0
        %1808 = vmatprep.subr.mxu0 0.0
        %1809 = vmatpush2.xpose.msra.mxu0 0.0
        %1810 = vmatprep.subr.mxu0 0.0
        %1811 = vmatpush2.xpose.msra.mxu0 0.0
        %1812 = vmatprep.subr.mxu0 0.0
        %1813 = vmatpush2.xpose.msra.mxu0 0.0
        %1814 = vmatprep.subr.mxu0 0.0
        %1815 = vmatpush2.xpose.msra.mxu0 0.0
        %1816 = vmatprep.subr.mxu0 0.0
        %1817 = vmatpush2.xpose.msra.mxu0 0.0
        %1818 = vmatprep.subr.mxu0 0.0
        %1819 = vmatpush2.xpose.msra.mxu0 0.0
        %1820 = vmatprep.subr.mxu0 0.0
        %1821 = vmatpush2.xpose.msra.mxu0 0.0
        %1822 = vmatprep.subr.mxu0 0.0
        %1823 = vmatpush2.xpose.msra.mxu0 0.0
        %1824 = vmatprep.subr.mxu0 0.0
        %1825 = vmatpush2.xpose.msra.mxu0 0.0
        %1826 = vmatprep.subr.mxu0 0.0
        %1827 = vmatpush2.xpose.msra.mxu0 0.0
        %1828 = vmatprep.subr.mxu0 0.0
        %1829 = vmatpush2.xpose.msra.mxu0 0.0
        %1830 = vmatprep.mubr.f32.mxu0 0.0
        %1831 = vmatmul.mubr.f32.gmra.mxu0 %v1574
        %v1832 = vpop.f32.mrf.mxu0
        %v1833 = vadd.f32 %v1752, %v1832
        %v1834 = vpop.f32.mrf.mxu0
        %1835 = vmatprep.mubr.f32.mxu0 0.0
        %1836 = vmatmul.mubr.f32.gmra.mxu0 %v1577
        %v1837 = vpop.f32.mrf.mxu0
        %v1838 = vadd.f32 %v1757, %v1837
        %v1839 = vpop.f32.mrf.mxu0
        %1840 = vdwg.mxu0
        %s1841 = scalar_lea.vmem %s8, 1
        %v1842 = vld [vmem:[%s1841] sm:$0x1]
        %v1844 = vlaneseq
        %v1845 = vshrl.u32 %v1844, 7
        %v1846 = vsub.s32 0, %v1845
        %v1847 = vrot.slane %v1842, %v1846
        %v1849 = vadd.f32 %v1833, %v1847
        %v1850 = vadd.f32 %v1838, %v1847
        %v1851 = vtanh.pop %v1849
        %v1852 = vtanh.pop %v1850
        %1853 = vst.msk [vmem:[%s347 + $0x10] sm:$0xff] %vm357, %v1851
        %1854 = vst.msk [vmem:[%s347 + $0x18] sm:$0xff] %vm357, %v1852
        %p1855 = scmp.lt.s32.totalorder %s21, 1
        %s1856 = scalar_select %p1855, %s21, 1
        %s1857 = smul.addr %s1856, 4
        %s1858 = smul.addr %s1857, 8
        %s1859 = scalar_lea.vmem %s9, %s1858
        // Predicated region
        $region61: #{tpu_custom_call.1} parent=55 // pred_check
          %p1860 = pneg %p233
        $region62: #{tpu_custom_call.1} parent=55 // pred_check_branch
          %1862 = sbr.rel (%p1860) target = $region64
        $region63: #{tpu_custom_call.1} parent=55 // pred_region
          _
        $region64: #{tpu_custom_call.1} parent=55 // pred_fallthru
          _
      $region56: #{tpu_custom_call.1} parent=5 // pred_fallthru
        _
      %p1863 = scmp.le.s32.totalorder 2, %s16
      // Predicated region
      $region65: #{tpu_custom_call.1} parent=5 // pred_check
        %p1864 = pneg %p1863
      $region66: #{tpu_custom_call.1} parent=5 // pred_check_branch
        %1866 = sbr.rel (%p1864) target = $region68
      $region67: #{tpu_custom_call.1} parent=5 // pred_region
        %s1867 = ssub.s32 %s16, 2
        // Predicated region
        $region69: #{tpu_custom_call.1} parent=67 // pred_check
          %p1868 = pneg %p239
        $region70: #{tpu_custom_call.1} parent=67 // pred_check_branch
          %1870 = sbr.rel (%p1868) target = $region72
        $region71: #{tpu_custom_call.1} parent=67 // pred_region
          %p1871 = scmp.lt.s32.totalorder %s22, 1
          %s1872 = scalar_select %p1871, %s22, 1
          %s1873 = smul.addr %s1872, 4
          %s1874 = smul.addr %s1873, 8
          %s1875 = scalar_lea.vmem %s9, %s1874
        $region72: #{tpu_custom_call.1} parent=67 // pred_fallthru
          _
      $region68: #{tpu_custom_call.1} parent=5 // pred_fallthru
        _
    $region6: #{tpu_custom_call.1} parent=1 // loop_footer
      %s20 = sadd.s32 1, %s16
    $region7: #{tpu_custom_call.1} parent=1 // loop_footer_branch
      %15 = sbr.rel target = $region3
    $region8: #{tpu_custom_call.1} parent=1 // loop_exit
      _
    %1876 = vsyncpa [#allocation3], 1
    %s1877 = scalar_lea.sflag [#allocation3], 1
    %1878 = vsyncpa %s1877, 1

</llo_original>
